<compile_context>
chip_gen: v7x
topology: tpu7x:2x2x1
jax: 0.10.0
libtpu: 0.0.40
codegen_flags: <defaults>
</compile_context>

<pallas_src>
import functools

import jax
import jax.numpy as jnp
from jax.experimental import pallas as pl
from jax.experimental.pallas import tpu as pltpu

INPUT_DIM = 32
HIDDEN = 64
HIDDEN2 = HIDDEN // 2
DROPOUT_RATE = 0.2
BATCH = 128          # per-step batch, fills the 128-lane axis
STEPS = 8            # independent forward passes fused onto the lane axis


def _stable_softplus(v):
    # log(1+exp(v)) without overflow for large v
    return jnp.maximum(v, 0.0) + jnp.log(1.0 + jnp.exp(-jnp.abs(v)))


def kintsugi_kernel(params_ref, xT_ref, masks_ref, tgt_ref, noise_ref,
                    w1_ref, w2_ref, bias_ref, out_ref, raw_sc):
    s_per, batch = out_ref.shape          # steps handled by this grid point, 128
    hidden = w1_ref.shape[0]
    hidden2 = w2_ref.shape[0]

    # ---- scalar module parameters (SMEM); computed once per call -----------
    care = params_ref[0]
    resilience = params_ref[1]
    gold = params_ref[2]
    temperature = params_ref[3]
    b3 = params_ref[4]
    care_w = _stable_softplus(jnp.full((1, 1), care, jnp.float32))      # softplus(care)
    res_f = jax.nn.sigmoid(jnp.full((1, 1), resilience, jnp.float32))   # sigmoid(resilience)

    # ---- dropout masks: int8 0/1 -> f32 (1/(1-p) folded into W2 / w3 col) --
    dm1 = masks_ref[0:hidden, :].astype(jnp.float32)                    # (64, N)
    dm2 = masks_ref[hidden:hidden + hidden2, :].astype(jnp.float32)     # (32, N)

    b1 = bias_ref[:, 0:1]                                               # (64, 1)
    b2 = bias_ref[0:hidden2, 1:2]                                       # (32, 1)
    w3s = bias_ref[0:hidden2, 2:3]                                      # (32, 1) = w3/(1-p)

    # ---- MLP on all fused steps at once (N = s_per * 128 lanes) ------------
    h1 = jnp.dot(w1_ref[...], xT_ref[...],
                 preferred_element_type=jnp.float32) + b1               # (64, N)
    h1 = (jnp.maximum(h1, 0.0) * dm1).astype(jnp.bfloat16)
    h2 = jnp.dot(w2_ref[...], h1,
                 preferred_element_type=jnp.float32) + b2               # (32, N)
    # final 32 -> 1 layer fused with dropout mask 2: VPU mul + sublane reduce
    h2 = jnp.maximum(h2, 0.0) * (dm2 * w3s)                             # (32, N)
    raw_row = (jnp.sum(h2, axis=0, keepdims=True) + b3) * care_w        # (1, N)

    # ---- relayout (1, s_per*128) -> (s_per, 128) via VMEM scratch ----------
    for s in range(s_per):
        raw_sc[s:s + 1, :] = raw_row[:, s * batch:(s + 1) * batch]
    raw2d = raw_sc[...]                                                 # (s_per, 128)

    # ---- kintsugi golden-error enhancement, per-step (per-row) statistics --
    tgt = tgt_ref[...]
    noise = noise_ref[...]
    err = jnp.abs(raw2d - tgt)
    mean_e = jnp.mean(err, axis=1, keepdims=True)                       # (s_per, 1)
    # torch.Tensor.std() is the unbiased estimator (divide by N-1)
    var_e = jnp.sum((err - mean_e) ** 2, axis=1, keepdims=True) / (batch - 1)
    inv_std = 1.0 / (jnp.sqrt(var_e) + 1e-8)
    mask = jax.nn.sigmoid(temperature * (err * inv_std - mean_e * inv_std))
    golden = gold * mask * noise * 0.1
    enhanced = raw2d + golden
    out_ref[...] = enhanced * res_f + raw2d * (1.0 - res_f)             # dense (s_per,128) store


def _grid_splits(steps: int) -> int:
    # v7x has 2 TensorCores -> split the fused steps 2-way; otherwise grid=(1,).
    try:
        kind = jax.devices()[0].device_kind.lower()
    except Exception:
        kind = ""
    g = 2 if ("v7" in kind or "tpu7" in kind) else 1
    return g if steps % g == 0 else 1


@functools.partial(jax.jit, static_argnames=("dropout_rate",))
def kintsugi_forward(params, x, target, noise, keep1, keep2, w1, b1, w2, b2, w3,
                     dropout_rate=DROPOUT_RATE):
    steps, batch, in_dim = x.shape
    hidden = w1.shape[0]
    hidden2 = w2.shape[0]
    inv_keep = 1.0 / (1.0 - dropout_rate)

    g = _grid_splits(steps)
    s_per = steps // g
    n_per = s_per * batch

    # ---- host-side layout plumbing: steps fused onto the 128*S lane axis ---
    xT = x.reshape(steps * batch, in_dim).T.astype(jnp.bfloat16)            # (32, S*B) bf16
    masks = jnp.concatenate(
        [keep1.astype(jnp.int8).reshape(steps * batch, hidden).T,           # (64, S*B) int8
         keep2.astype(jnp.int8).reshape(steps * batch, hidden2).T],         # (32, S*B) int8
        axis=0)                                                             # (96, S*B)
    w1b = w1.astype(jnp.bfloat16)
    w2b = (w2 * inv_keep).astype(jnp.bfloat16)              # fold dropout-1 scale
    bias_cols = jnp.zeros((hidden, 4), jnp.float32)
    bias_cols = bias_cols.at[:, 0].set(b1)
    bias_cols = bias_cols.at[:hidden2, 1].set(b2)
    bias_cols = bias_cols.at[:hidden2, 2].set(w3[0] * inv_keep)             # fold dropout-2 scale
    tgt3 = target.reshape(g, s_per, batch)
    noi3 = noise.reshape(g, s_per, batch)

    out = pl.pallas_call(
        kintsugi_kernel,
        out_shape=jax.ShapeDtypeStruct((g, s_per, batch), jnp.float32),
        grid=(g,),
        in_specs=[
            pl.BlockSpec(memory_space=pltpu.MemorySpace.SMEM),               # scalar params
            pl.BlockSpec((in_dim, n_per), lambda i: (0, i)),                 # x^T (bf16)
            pl.BlockSpec((hidden + hidden2, n_per), lambda i: (0, i)),       # int8 mask slab
            pl.BlockSpec((None, s_per, batch), lambda i: (i, 0, 0)),         # target
            pl.BlockSpec((None, s_per, batch), lambda i: (i, 0, 0)),         # noise
            pl.BlockSpec((hidden, in_dim), lambda i: (0, 0)),                # W1 (VMEM resident)
            pl.BlockSpec((hidden2, hidden), lambda i: (0, 0)),               # W2 (VMEM resident)
            pl.BlockSpec((hidden, 4), lambda i: (0, 0)),                     # b1|b2|w3 columns
        ],
        out_specs=pl.BlockSpec((None, s_per, batch), lambda i: (i, 0, 0)),   # dense output block
        scratch_shapes=[pltpu.VMEM((s_per, batch), jnp.float32)],
        compiler_params=pltpu.CompilerParams(dimension_semantics=("parallel",)),
    )(params, xT, masks, tgt3, noi3, w1b, w2b, bias_cols)
    return out.reshape(steps, batch)


if __name__ == "__main__":
    key = jax.random.PRNGKey(0)
    ks = jax.random.split(key, 8)

    # ---- deterministic example inputs: STEPS forwards, batch=128 each ------
    x = jax.random.normal(ks[0], (STEPS, BATCH, INPUT_DIM), jnp.float32)
    target = jax.random.normal(ks[1], (STEPS, BATCH), jnp.float32)

    # torch Linear-style init; weights kept in torch (out_features, in_features) layout
    def linear_init(k, fan_in, fan_out):
        kw, kb = jax.random.split(k)
        bound = 1.0 / float(fan_in) ** 0.5
        w = jax.random.uniform(kw, (fan_out, fan_in), jnp.float32, -bound, bound)
        b = jax.random.uniform(kb, (fan_out,), jnp.float32, -bound, bound)
        return w, b

    w1, b1 = linear_init(ks[2], INPUT_DIM, HIDDEN)
    w2, b2 = linear_init(ks[3], HIDDEN, HIDDEN2)
    w3, b3 = linear_init(ks[4], HIDDEN2, 1)      # w3: (1, 32), b3: (1,)

    # module scalars: care=1.0, resilience=0.8, gold=0.3, temperature=2.0 (+ b3)
    params = jnp.concatenate([
        jnp.array([1.0, 0.8, 0.3, 2.0], jnp.float32),
        b3.astype(jnp.float32),
        jnp.zeros((3,), jnp.float32),
    ])                                           # (8,) SMEM vector

    # host-side random draws (see RNG TODO above)
    noise = jax.random.normal(ks[5], (STEPS, BATCH), jnp.float32)
    keep1 = jax.random.bernoulli(ks[6], 1.0 - DROPOUT_RATE, (STEPS, BATCH, HIDDEN))
    keep2 = jax.random.bernoulli(ks[7], 1.0 - DROPOUT_RATE, (STEPS, BATCH, HIDDEN2))

    out = kintsugi_forward(params, x, target, noise, keep1, keep2, w1, b1, w2, b2, w3)
    jax.block_until_ready(out)
    assert out.shape == (STEPS, BATCH) and out.dtype == jnp.float32

    # ---- correctness check against a pure-JAX f32 reference ----------------
    dm1 = keep1.astype(jnp.float32) / (1.0 - DROPOUT_RATE)
    dm2 = keep2.astype(jnp.float32) / (1.0 - DROPOUT_RATE)
    care_w = jax.nn.softplus(params[0])
    res_f = jax.nn.sigmoid(params[1])
    h1r = jnp.maximum(jnp.einsum("sbi,hi->sbh", x, w1) + b1, 0.0) * dm1
    h2r = jnp.maximum(jnp.einsum("sbh,kh->sbk", h1r, w2) + b2, 0.0) * dm2
    raw = (jnp.einsum("sbk,ok->sbo", h2r, w3)[..., 0] + b3[0]) * care_w      # (STEPS, B)
    err = jnp.abs(raw - target)
    mean_e = jnp.mean(err, axis=1, keepdims=True)
    std_e = jnp.sqrt(jnp.sum((err - mean_e) ** 2, axis=1, keepdims=True) / (BATCH - 1))
    err_n = err / (std_e + 1e-8)
    msk = jax.nn.sigmoid(params[3] * (err_n - jnp.mean(err_n, axis=1, keepdims=True)))
    ref = (raw + params[2] * msk * noise * 0.1) * res_f + raw * (1.0 - res_f)
    max_diff = float(jnp.max(jnp.abs(out - ref)))
    assert max_diff < 0.1, f"kernel deviates from reference: {max_diff}"

    print("KERNEL_OK")
</pallas_src>

<mosaic_0001>
module attributes {stable_mosaic.version = 11 : i64} {
  func.func @kintsugi_kernel(%arg0: i32, %arg1: memref<8xf32, #tpu.memory_space<smem>>, %arg2: memref<32x1024xbf16, #tpu.memory_space<vmem>>, %arg3: memref<96x1024xi8, #tpu.memory_space<vmem>>, %arg4: memref<1x8x128xf32, #tpu.memory_space<vmem>>, %arg5: memref<1x8x128xf32, #tpu.memory_space<vmem>>, %arg6: memref<64x32xbf16, #tpu.memory_space<vmem>>, %arg7: memref<32x64xbf16, #tpu.memory_space<vmem>>, %arg8: memref<64x4xf32, #tpu.memory_space<vmem>>, %arg9: memref<1x8x128xf32, #tpu.memory_space<vmem>>, %arg10: memref<8x128xf32, #tpu.memory_space<vmem>>) attributes {dimension_semantics = [#tpu.dimension_semantics<parallel>], iteration_bounds = array<i64: 1>, scalar_prefetch = 0 : i64, scratch_operands = 1 : i64, tpu.core_type = #tpu.core_type<tc>, window_params = [{transform_indices = @transform_0, window_bounds = array<i64: 8>}, {transform_indices = @transform_1, window_bounds = array<i64: 32, 1024>}, {transform_indices = @transform_2, window_bounds = array<i64: 96, 1024>}, {transform_indices = @transform_3, window_bounds = array<i64: 1, 8, 128>}, {transform_indices = @transform_4, window_bounds = array<i64: 1, 8, 128>}, {pipeline_mode = #tpu.pipeline_mode<synchronous>, transform_indices = @transform_5, window_bounds = array<i64: 64, 32>}, {pipeline_mode = #tpu.pipeline_mode<synchronous>, transform_indices = @transform_6, window_bounds = array<i64: 32, 64>}, {pipeline_mode = #tpu.pipeline_mode<synchronous>, transform_indices = @transform_7, window_bounds = array<i64: 64, 4>}, {transform_indices = @transform_8, window_bounds = array<i64: 1, 8, 128>}]} {
    %c0 = arith.constant 0 : index
    %0 = memref.load %arg1[%c0] : memref<8xf32, #tpu.memory_space<smem>>
    %c1 = arith.constant 1 : index
    %1 = memref.load %arg1[%c1] : memref<8xf32, #tpu.memory_space<smem>>
    %c2 = arith.constant 2 : index
    %2 = memref.load %arg1[%c2] : memref<8xf32, #tpu.memory_space<smem>>
    %c3 = arith.constant 3 : index
    %3 = memref.load %arg1[%c3] : memref<8xf32, #tpu.memory_space<smem>>
    %c4 = arith.constant 4 : index
    %4 = memref.load %arg1[%c4] : memref<8xf32, #tpu.memory_space<smem>>
    %5 = vector.broadcast %0 : f32 to vector<1x1xf32>
    %cst = arith.constant 0.000000e+00 : f32
    %6 = vector.broadcast %cst : f32 to vector<1x1xf32>
    %7 = arith.maximumf %5, %6 : vector<1x1xf32>
    %8 = math.absf %5 : vector<1x1xf32>
    %cst_0 = arith.constant 0.000000e+00 : f32
    %9 = vector.broadcast %cst_0 : f32 to vector<1x1xf32>
    %10 = arith.subf %9, %8 : vector<1x1xf32>
    %11 = math.exp %10 : vector<1x1xf32>
    %cst_1 = arith.constant 1.000000e+00 : f32
    %12 = vector.broadcast %cst_1 : f32 to vector<1x1xf32>
    %13 = arith.addf %12, %11 : vector<1x1xf32>
    %14 = math.log %13 : vector<1x1xf32>
    %15 = arith.addf %7, %14 : vector<1x1xf32>
    %16 = vector.broadcast %1 : f32 to vector<1x1xf32>
    %17 = arith.negf %16 : vector<1x1xf32>
    %18 = math.exp %17 : vector<1x1xf32>
    %cst_2 = arith.constant 1.000000e+00 : f32
    %19 = vector.broadcast %cst_2 : f32 to vector<1x1xf32>
    %20 = arith.addf %19, %18 : vector<1x1xf32>
    %21 = arith.divf %19, %20 : vector<1x1xf32>
    %c0_3 = arith.constant 0 : index
    %c0_4 = arith.constant 0 : index
    %22 = vector.load %arg3[%c0_3, %c0_4] : memref<96x1024xi8, #tpu.memory_space<vmem>>, vector<64x1024xi8>
    %23 = arith.sitofp %22 : vector<64x1024xi8> to vector<64x1024xf32>
    %c64 = arith.constant 64 : index
    %c0_5 = arith.constant 0 : index
    %24 = vector.load %arg3[%c64, %c0_5] : memref<96x1024xi8, #tpu.memory_space<vmem>>, vector<32x1024xi8>
    %25 = arith.sitofp %24 : vector<32x1024xi8> to vector<32x1024xf32>
    %c0_6 = arith.constant 0 : index
    %c0_7 = arith.constant 0 : index
    %26 = vector.load %arg8[%c0_6, %c0_7] : memref<64x4xf32, #tpu.memory_space<vmem>>, vector<64x1xf32>
    %c0_8 = arith.constant 0 : index
    %c1_9 = arith.constant 1 : index
    %27 = vector.load %arg8[%c0_8, %c1_9] : memref<64x4xf32, #tpu.memory_space<vmem>>, vector<32x1xf32>
    %c0_10 = arith.constant 0 : index
    %c2_11 = arith.constant 2 : index
    %28 = vector.load %arg8[%c0_10, %c2_11] : memref<64x4xf32, #tpu.memory_space<vmem>>, vector<32x1xf32>
    %c0_12 = arith.constant 0 : index
    %c0_13 = arith.constant 0 : index
    %29 = vector.load %arg6[%c0_12, %c0_13] : memref<64x32xbf16, #tpu.memory_space<vmem>>, vector<64x32xbf16>
    %c0_14 = arith.constant 0 : index
    %c0_15 = arith.constant 0 : index
    %30 = vector.load %arg2[%c0_14, %c0_15] : memref<32x1024xbf16, #tpu.memory_space<vmem>>, vector<32x1024xbf16>
    %cst_16 = arith.constant dense<0.000000e+00> : vector<64x1024xf32>
    %31 = tpu.matmul %29, %30, %cst_16 {dimension_numbers = #tpu.dot_dimension_numbers<[1], [0], [0], [1], [0, 0, 1, 1], [], []>} : vector<64x32xbf16>, vector<32x1024xbf16>, vector<64x1024xf32> -> vector<64x1024xf32>
    %32 = vector.broadcast %26 : vector<64x1xf32> to vector<64x1024xf32>
    %33 = arith.addf %31, %32 : vector<64x1024xf32>
    %cst_17 = arith.constant 0.000000e+00 : f32
    %34 = vector.broadcast %cst_17 : f32 to vector<64x1024xf32>
    %35 = arith.maximumf %33, %34 : vector<64x1024xf32>
    %36 = arith.mulf %35, %23 : vector<64x1024xf32>
    %37 = arith.truncf %36 : vector<64x1024xf32> to vector<64x1024xbf16>
    %c0_18 = arith.constant 0 : index
    %c0_19 = arith.constant 0 : index
    %38 = vector.load %arg7[%c0_18, %c0_19] : memref<32x64xbf16, #tpu.memory_space<vmem>>, vector<32x64xbf16>
    %cst_20 = arith.constant dense<0.000000e+00> : vector<32x1024xf32>
    %39 = tpu.matmul %38, %37, %cst_20 {dimension_numbers = #tpu.dot_dimension_numbers<[1], [0], [0], [1], [0, 0, 1, 1], [], []>} : vector<32x64xbf16>, vector<64x1024xbf16>, vector<32x1024xf32> -> vector<32x1024xf32>
    %40 = vector.broadcast %27 : vector<32x1xf32> to vector<32x1024xf32>
    %41 = arith.addf %39, %40 : vector<32x1024xf32>
    %cst_21 = arith.constant 0.000000e+00 : f32
    %42 = vector.broadcast %cst_21 : f32 to vector<32x1024xf32>
    %43 = arith.maximumf %41, %42 : vector<32x1024xf32>
    %44 = vector.broadcast %28 : vector<32x1xf32> to vector<32x1024xf32>
    %45 = arith.mulf %25, %44 : vector<32x1024xf32>
    %46 = arith.mulf %43, %45 : vector<32x1024xf32>
    %cst_22 = arith.constant dense<0.000000e+00> : vector<1024xf32>
    %47 = vector.multi_reduction <add>, %46, %cst_22 [0] : vector<32x1024xf32> to vector<1024xf32>
    %48 = vector.shape_cast %47 : vector<1024xf32> to vector<1x1024xf32>
    %49 = vector.broadcast %4 : f32 to vector<1x1024xf32>
    %50 = arith.addf %48, %49 : vector<1x1024xf32>
    %51 = vector.broadcast %15 : vector<1x1xf32> to vector<1x1024xf32>
    %52 = arith.mulf %50, %51 : vector<1x1024xf32>
    %53 = vector.extract_strided_slice %52 {offsets = [0, 0], sizes = [1, 128], strides = [1, 1]} : vector<1x1024xf32> to vector<1x128xf32>
    %c0_23 = arith.constant 0 : index
    %c0_24 = arith.constant 0 : index
    %54 = vector.load %arg10[%c0_23, %c0_24] : memref<8x128xf32, #tpu.memory_space<vmem>>, vector<1x128xf32>
    tpu.vector_store %arg10[%c0_23, %c0_24], %53 {strides = array<i32>} : memref<8x128xf32, #tpu.memory_space<vmem>>, vector<1x128xf32>,
    %55 = vector.extract_strided_slice %52 {offsets = [0, 128], sizes = [1, 128], strides = [1, 1]} : vector<1x1024xf32> to vector<1x128xf32>
    %c1_25 = arith.constant 1 : index
    %c0_26 = arith.constant 0 : index
    %56 = vector.load %arg10[%c1_25, %c0_26] : memref<8x128xf32, #tpu.memory_space<vmem>>, vector<1x128xf32>
    tpu.vector_store %arg10[%c1_25, %c0_26], %55 {strides = array<i32>} : memref<8x128xf32, #tpu.memory_space<vmem>>, vector<1x128xf32>,
    %57 = vector.extract_strided_slice %52 {offsets = [0, 256], sizes = [1, 128], strides = [1, 1]} : vector<1x1024xf32> to vector<1x128xf32>
    %c2_27 = arith.constant 2 : index
    %c0_28 = arith.constant 0 : index
    %58 = vector.load %arg10[%c2_27, %c0_28] : memref<8x128xf32, #tpu.memory_space<vmem>>, vector<1x128xf32>
    tpu.vector_store %arg10[%c2_27, %c0_28], %57 {strides = array<i32>} : memref<8x128xf32, #tpu.memory_space<vmem>>, vector<1x128xf32>,
    %59 = vector.extract_strided_slice %52 {offsets = [0, 384], sizes = [1, 128], strides = [1, 1]} : vector<1x1024xf32> to vector<1x128xf32>
    %c3_29 = arith.constant 3 : index
    %c0_30 = arith.constant 0 : index
    %60 = vector.load %arg10[%c3_29, %c0_30] : memref<8x128xf32, #tpu.memory_space<vmem>>, vector<1x128xf32>
    tpu.vector_store %arg10[%c3_29, %c0_30], %59 {strides = array<i32>} : memref<8x128xf32, #tpu.memory_space<vmem>>, vector<1x128xf32>,
    %61 = vector.extract_strided_slice %52 {offsets = [0, 512], sizes = [1, 128], strides = [1, 1]} : vector<1x1024xf32> to vector<1x128xf32>
    %c4_31 = arith.constant 4 : index
    %c0_32 = arith.constant 0 : index
    %62 = vector.load %arg10[%c4_31, %c0_32] : memref<8x128xf32, #tpu.memory_space<vmem>>, vector<1x128xf32>
    tpu.vector_store %arg10[%c4_31, %c0_32], %61 {strides = array<i32>} : memref<8x128xf32, #tpu.memory_space<vmem>>, vector<1x128xf32>,
    %63 = vector.extract_strided_slice %52 {offsets = [0, 640], sizes = [1, 128], strides = [1, 1]} : vector<1x1024xf32> to vector<1x128xf32>
    %c5 = arith.constant 5 : index
    %c0_33 = arith.constant 0 : index
    %64 = vector.load %arg10[%c5, %c0_33] : memref<8x128xf32, #tpu.memory_space<vmem>>, vector<1x128xf32>
    tpu.vector_store %arg10[%c5, %c0_33], %63 {strides = array<i32>} : memref<8x128xf32, #tpu.memory_space<vmem>>, vector<1x128xf32>,
    %65 = vector.extract_strided_slice %52 {offsets = [0, 768], sizes = [1, 128], strides = [1, 1]} : vector<1x1024xf32> to vector<1x128xf32>
    %c6 = arith.constant 6 : index
    %c0_34 = arith.constant 0 : index
    %66 = vector.load %arg10[%c6, %c0_34] : memref<8x128xf32, #tpu.memory_space<vmem>>, vector<1x128xf32>
    tpu.vector_store %arg10[%c6, %c0_34], %65 {strides = array<i32>} : memref<8x128xf32, #tpu.memory_space<vmem>>, vector<1x128xf32>,
    %67 = vector.extract_strided_slice %52 {offsets = [0, 896], sizes = [1, 128], strides = [1, 1]} : vector<1x1024xf32> to vector<1x128xf32>
    %c7 = arith.constant 7 : index
    %c0_35 = arith.constant 0 : index
    %68 = vector.load %arg10[%c7, %c0_35] : memref<8x128xf32, #tpu.memory_space<vmem>>, vector<1x128xf32>
    tpu.vector_store %arg10[%c7, %c0_35], %67 {strides = array<i32>} : memref<8x128xf32, #tpu.memory_space<vmem>>, vector<1x128xf32>,
    %c0_36 = arith.constant 0 : index
    %c0_37 = arith.constant 0 : index
    %69 = vector.load %arg10[%c0_36, %c0_37] : memref<8x128xf32, #tpu.memory_space<vmem>>, vector<8x128xf32>
    %c0_38 = arith.constant 0 : index
    %c0_39 = arith.constant 0 : index
    %c0_40 = arith.constant 0 : index
    %70 = vector.load %arg4[%c0_38, %c0_39, %c0_40] : memref<1x8x128xf32, #tpu.memory_space<vmem>>, vector<1x8x128xf32>
    %71 = vector.shape_cast %70 : vector<1x8x128xf32> to vector<8x128xf32>
    %c0_41 = arith.constant 0 : index
    %c0_42 = arith.constant 0 : index
    %c0_43 = arith.constant 0 : index
    %72 = vector.load %arg5[%c0_41, %c0_42, %c0_43] : memref<1x8x128xf32, #tpu.memory_space<vmem>>, vector<1x8x128xf32>
    %73 = vector.shape_cast %72 : vector<1x8x128xf32> to vector<8x128xf32>
    %74 = arith.subf %69, %71 : vector<8x128xf32>
    %75 = math.absf %74 : vector<8x128xf32>
    %cst_44 = arith.constant dense<0.000000e+00> : vector<8xf32>
    %76 = vector.multi_reduction <add>, %75, %cst_44 [1] : vector<8x128xf32> to vector<8xf32>
    %77 = vector.shape_cast %76 : vector<8xf32> to vector<8x1xf32>
    %cst_45 = arith.constant 1.280000e+02 : f32
    %78 = vector.broadcast %cst_45 : f32 to vector<8x1xf32>
    %79 = arith.divf %77, %78 : vector<8x1xf32>
    %80 = vector.broadcast %79 : vector<8x1xf32> to vector<8x128xf32>
    %81 = arith.subf %75, %80 : vector<8x128xf32>
    %82 = arith.mulf %81, %81 : vector<8x128xf32>
    %cst_46 = arith.constant dense<0.000000e+00> : vector<8xf32>
    %83 = vector.multi_reduction <add>, %82, %cst_46 [1] : vector<8x128xf32> to vector<8xf32>
    %84 = vector.shape_cast %83 : vector<8xf32> to vector<8x1xf32>
    %cst_47 = arith.constant 1.270000e+02 : f32
    %85 = vector.broadcast %cst_47 : f32 to vector<8x1xf32>
    %86 = arith.divf %84, %85 : vector<8x1xf32>
    %87 = math.sqrt %86 : vector<8x1xf32>
    %cst_48 = arith.constant 9.99999993E-9 : f32
    %88 = vector.broadcast %cst_48 : f32 to vector<8x1xf32>
    %89 = arith.addf %87, %88 : vector<8x1xf32>
    %cst_49 = arith.constant 1.000000e+00 : f32
    %90 = vector.broadcast %cst_49 : f32 to vector<8x1xf32>
    %91 = arith.divf %90, %89 : vector<8x1xf32>
    %92 = vector.broadcast %91 : vector<8x1xf32> to vector<8x128xf32>
    %93 = arith.mulf %75, %92 : vector<8x128xf32>
    %94 = arith.mulf %79, %91 : vector<8x1xf32>
    %95 = vector.broadcast %94 : vector<8x1xf32> to vector<8x128xf32>
    %96 = arith.subf %93, %95 : vector<8x128xf32>
    %97 = vector.broadcast %3 : f32 to vector<8x128xf32>
    %98 = arith.mulf %97, %96 : vector<8x128xf32>
    %99 = arith.negf %98 : vector<8x128xf32>
    %100 = math.exp %99 : vector<8x128xf32>
    %cst_50 = arith.constant 1.000000e+00 : f32
    %101 = vector.broadcast %cst_50 : f32 to vector<8x128xf32>
    %102 = arith.addf %101, %100 : vector<8x128xf32>
    %103 = arith.divf %101, %102 : vector<8x128xf32>
    %104 = vector.broadcast %2 : f32 to vector<8x128xf32>
    %105 = arith.mulf %104, %103 : vector<8x128xf32>
    %106 = arith.mulf %105, %73 : vector<8x128xf32>
    %cst_51 = arith.constant 1.000000e-01 : f32
    %107 = vector.broadcast %cst_51 : f32 to vector<8x128xf32>
    %108 = arith.mulf %106, %107 : vector<8x128xf32>
    %109 = arith.addf %69, %108 : vector<8x128xf32>
    %110 = vector.broadcast %21 : vector<1x1xf32> to vector<8x128xf32>
    %111 = arith.mulf %109, %110 : vector<8x128xf32>
    %cst_52 = arith.constant 1.000000e+00 : f32
    %112 = vector.broadcast %cst_52 : f32 to vector<1x1xf32>
    %113 = arith.subf %112, %21 : vector<1x1xf32>
    %114 = vector.broadcast %113 : vector<1x1xf32> to vector<8x128xf32>
    %115 = arith.mulf %69, %114 : vector<8x128xf32>
    %116 = arith.addf %111, %115 : vector<8x128xf32>
    %c0_53 = arith.constant 0 : index
    %c0_54 = arith.constant 0 : index
    %c0_55 = arith.constant 0 : index
    %117 = vector.load %arg9[%c0_53, %c0_54, %c0_55] : memref<1x8x128xf32, #tpu.memory_space<vmem>>, vector<1x8x128xf32>
    %118 = vector.shape_cast %117 : vector<1x8x128xf32> to vector<8x128xf32>
    %119 = vector.shape_cast %116 : vector<8x128xf32> to vector<1x8x128xf32>
    tpu.vector_store %arg9[%c0_53, %c0_54, %c0_55], %119 {strides = array<i32>} : memref<1x8x128xf32, #tpu.memory_space<vmem>>, vector<1x8x128xf32>,
    return
  }
  func.func @transform_0(%arg0: i32) -> i32 {
    %c0_i32 = arith.constant 0 : i32
    %c0_i32_0 = arith.constant 0 : i32
    return %c0_i32 : i32
  }
  func.func @transform_1(%arg0: i32) -> (i32, i32) {
    %c0_i32 = arith.constant 0 : i32
    %c0_i32_0 = arith.constant 0 : i32
    return %c0_i32, %arg0 : i32, i32
  }
  func.func @transform_2(%arg0: i32) -> (i32, i32) {
    %c0_i32 = arith.constant 0 : i32
    %c0_i32_0 = arith.constant 0 : i32
    return %c0_i32, %arg0 : i32, i32
  }
  func.func @transform_3(%arg0: i32) -> (i32, i32, i32) {
    %c0_i32 = arith.constant 0 : i32
    %c0_i32_0 = arith.constant 0 : i32
    %c0_i32_1 = arith.constant 0 : i32
    return %arg0, %c0_i32, %c0_i32_0 : i32, i32, i32
  }
  func.func @transform_4(%arg0: i32) -> (i32, i32, i32) {
    %c0_i32 = arith.constant 0 : i32
    %c0_i32_0 = arith.constant 0 : i32
    %c0_i32_1 = arith.constant 0 : i32
    return %arg0, %c0_i32, %c0_i32_0 : i32, i32, i32
  }
  func.func @transform_5(%arg0: i32) -> (i32, i32) {
    %c0_i32 = arith.constant 0 : i32
    %c0_i32_0 = arith.constant 0 : i32
    %c0_i32_1 = arith.constant 0 : i32
    return %c0_i32, %c0_i32_0 : i32, i32
  }
  func.func @transform_6(%arg0: i32) -> (i32, i32) {
    %c0_i32 = arith.constant 0 : i32
    %c0_i32_0 = arith.constant 0 : i32
    %c0_i32_1 = arith.constant 0 : i32
    return %c0_i32, %c0_i32_0 : i32, i32
  }
  func.func @transform_7(%arg0: i32) -> (i32, i32) {
    %c0_i32 = arith.constant 0 : i32
    %c0_i32_0 = arith.constant 0 : i32
    %c0_i32_1 = arith.constant 0 : i32
    return %c0_i32, %c0_i32_0 : i32, i32
  }
  func.func @transform_8(%arg0: i32) -> (i32, i32, i32) {
    %c0_i32 = arith.constant 0 : i32
    %c0_i32_0 = arith.constant 0 : i32
    %c0_i32_1 = arith.constant 0 : i32
    return %arg0, %c0_i32, %c0_i32_0 : i32, i32, i32
  }
}

</mosaic_0001>

<llo_original>
// kernel: kintsugi_forward.1
$region0: #{kintsugi_forward.1}
  #allocation0 [shape = 'u32[]', space=smem, size = 0x4, offset = 0x4, fixed_abs, tag = 'smem constant byte address 0x4 - core index']
  #allocation1 [shape = 'u32[144,128]{1,0:T(1,128)}', space=vmem, size = 0x12000, scoped, tag = 'internal scratch']
  #allocation2 [shape = 'f32[8,128]{1,0:T(8,128)}', space=vmem, size = 0x1000, scoped, tag = 'scratch operand']
  %s0 = inlined_call_operand.vmem [shape: f32[8], index: 0, kind: input, shape index: {}]
  %s1 = inlined_call_operand.vmem [shape: bf16[32,1024], index: 1, kind: input, shape index: {}]
  %s2 = inlined_call_operand.vmem [shape: s8[96,1024], index: 2, kind: input, shape index: {}]
  %s3 = inlined_call_operand.vmem [shape: f32[1,8,128], index: 3, kind: input, shape index: {}]
  %s4 = inlined_call_operand.vmem [shape: f32[1,8,128], index: 4, kind: input, shape index: {}]
  %s5 = inlined_call_operand.vmem [shape: bf16[64,32], index: 5, kind: input, shape index: {}]
  %s6 = inlined_call_operand.vmem [shape: bf16[32,64], index: 6, kind: input, shape index: {}]
  %s7 = inlined_call_operand.vmem [shape: f32[64,4], index: 7, kind: input, shape index: {}]
  %s8 = inlined_call_operand.hbm [shape: f32[1,8,128], index: 8, kind: output, shape index: {}]
  %s9 = sld [smem:[#allocation0]]
  $region46: #{kintsugi_forward.1} parent=0
    _
  %s11 = ssub.s32 1, %s9
  %s12 = scalar_select 0, %s11, %s9
  $region1: #{kintsugi_forward.1} parent=0
    #allocation3 [shape = 'u8[512]{0}', space=smem, size = 0x200, scoped, tag = 'input window, operand 0, single buffered']
    #allocation4 [shape = 's32[1]{0}', space=sflag, size = 0x4, scoped, tag = 'scoped memory for kintsugi_forward.1']
    #allocation5 [shape = 's32[1]{0}', space=sflag, size = 0x4, scoped, tag = 'scoped memory for kintsugi_forward.1']
    #allocation6 [shape = 'u8[4096]{0}', space=vmem, size = 0x1000, scoped, tag = 'output window, operand 0, single buffered']
    %13 = vsyncpa [#allocation5], 0
    %14 = vsyncpa [#allocation4], 0
    // Predicated region
    $region2: #{kintsugi_forward.1} parent=1 // pred_check
      _
    $region3: #{kintsugi_forward.1} parent=1 // pred_check_branch
      %16 = sbr.rel (0) target = $region5
    $region4: #{kintsugi_forward.1} parent=1 // pred_region
      %s18 = ssub.s32 16, 16
      %19 = vsyncadd [#allocation5], %s18
      %s21 = sshll.u32 %s0, 4
      %s22 = int_to_ptr.vmem [resolvable:$true] %s21
      %24 = dma.vmem_to_smem %s22, 16, [#allocation3], [#allocation5]
    $region5: #{kintsugi_forward.1} parent=1 // pred_fallthru
      _
    // Predicated region
    $region6: #{kintsugi_forward.1} parent=1 // pred_check
      _
    $region7: #{kintsugi_forward.1} parent=1 // pred_check_branch
      %26 = sbr.rel (0) target = $region9
    $region8: #{kintsugi_forward.1} parent=1 // pred_region
      _
    $region9: #{kintsugi_forward.1} parent=1 // pred_fallthru
      _
    // Predicated region
    $region10: #{kintsugi_forward.1} parent=1 // pred_check
      _
    $region11: #{kintsugi_forward.1} parent=1 // pred_check_branch
      %28 = sbr.rel (0) target = $region13
    $region12: #{kintsugi_forward.1} parent=1 // pred_region
      _
    $region13: #{kintsugi_forward.1} parent=1 // pred_fallthru
      _
    // Predicated region
    $region14: #{kintsugi_forward.1} parent=1 // pred_check
      _
    $region15: #{kintsugi_forward.1} parent=1 // pred_check_branch
      %30 = sbr.rel (0) target = $region17
    $region16: #{kintsugi_forward.1} parent=1 // pred_region
      _
    $region17: #{kintsugi_forward.1} parent=1 // pred_fallthru
      _
    // Predicated region
    $region18: #{kintsugi_forward.1} parent=1 // pred_check
      _
    $region19: #{kintsugi_forward.1} parent=1 // pred_check_branch
      %32 = sbr.rel (0) target = $region21
    $region20: #{kintsugi_forward.1} parent=1 // pred_region
      _
    $region21: #{kintsugi_forward.1} parent=1 // pred_fallthru
      _
    // Predicated region
    $region22: #{kintsugi_forward.1} parent=1 // pred_check
      _
    $region23: #{kintsugi_forward.1} parent=1 // pred_check_branch
      %34 = sbr.rel (0) target = $region25
    $region24: #{kintsugi_forward.1} parent=1 // pred_region
      _
    $region25: #{kintsugi_forward.1} parent=1 // pred_fallthru
      _
    // Predicated region
    $region26: #{kintsugi_forward.1} parent=1 // pred_check
      _
    $region27: #{kintsugi_forward.1} parent=1 // pred_check_branch
      %36 = sbr.rel (0) target = $region29
    $region28: #{kintsugi_forward.1} parent=1 // pred_region
      _
    $region29: #{kintsugi_forward.1} parent=1 // pred_fallthru
      _
    // Predicated region
    $region30: #{kintsugi_forward.1} parent=1 // pred_check
      _
    $region31: #{kintsugi_forward.1} parent=1 // pred_check_branch
      %38 = sbr.rel (0) target = $region33
    $region32: #{kintsugi_forward.1} parent=1 // pred_region
      _
    $region33: #{kintsugi_forward.1} parent=1 // pred_fallthru
      _
    // Predicated region
    $region34: #{kintsugi_forward.1} parent=1 // pred_check
      _
    $region35: #{kintsugi_forward.1} parent=1 // pred_check_branch
      %40 = sbr.rel (0) target = $region37
    $region36: #{kintsugi_forward.1} parent=1 // pred_region
      %41 = dma.done [#allocation5], 16
    $region37: #{kintsugi_forward.1} parent=1 // pred_fallthru
      _
    %42 = sfence
    %s44 = sld [smem:[#allocation3]]
    %s45 = sld [smem:[#allocation3 + $0x1]]
    %s46 = sld [smem:[#allocation3 + $0x2]]
    %s47 = sld [smem:[#allocation3 + $0x3]]
    %s48 = sld [smem:[#allocation3 + $0x4]]
    %v49 = vstv %s44
    %v50 = vmax.f32 %v49, 0.0
    %v51 = vand.u32 2147483647, %v49
    %v52 = vsub.f32 0.0, %v51
    %v53 = vmul.f32 %v52, 1.442695
    %v54 = vpow.pop %v53
    %v55 = vadd.f32 %v54, 1.0
    %v56 = vlog2.pop %v55
    %v57 = vmul.f32 %v56, 0.6931472
    %v58 = vadd.f32 %v50, %v57
    %v59 = vstv %s45
    %v60 = vxor.u32 %v59, 2147483648
    %v61 = vmul.f32 %v60, 1.442695
    %v62 = vpow.pop %v61
    %v63 = vadd.f32 %v62, 1.0
    %v64 = vrcp.pop %v63
    %v65 = vmul.f32 1.0, %v64
    %v66 = vld [vmem:[%s2] sm:$0xff]
    %v67 = vld [vmem:[%s2 + $0x8] sm:$0xff]
    %v68 = vld [vmem:[%s2 + $0x10] sm:$0xff]
    %v69 = vld [vmem:[%s2 + $0x18] sm:$0xff]
    %v70 = vld [vmem:[%s2 + $0x20] sm:$0xff]
    %v71 = vld [vmem:[%s2 + $0x28] sm:$0xff]
    %v72 = vld [vmem:[%s2 + $0x30] sm:$0xff]
    %v73 = vld [vmem:[%s2 + $0x38] sm:$0xff]
    %v74 = vld [vmem:[%s2 + $0x40] sm:$0xff]
    %v75 = vld [vmem:[%s2 + $0x48] sm:$0xff]
    %v76 = vld [vmem:[%s2 + $0x50] sm:$0xff]
    %v77 = vld [vmem:[%s2 + $0x58] sm:$0xff]
    %v78 = vld [vmem:[%s2 + $0x60] sm:$0xff]
    %v79 = vld [vmem:[%s2 + $0x68] sm:$0xff]
    %v80 = vld [vmem:[%s2 + $0x70] sm:$0xff]
    %v81 = vld [vmem:[%s2 + $0x78] sm:$0xff]
    %v82 = vunpack.c.0.s8 %v66
    %v83 = vunpack.c.0.s8 %v67
    %v84 = vunpack.c.0.s8 %v68
    %v85 = vunpack.c.0.s8 %v69
    %v86 = vunpack.c.0.s8 %v70
    %v87 = vunpack.c.0.s8 %v71
    %v88 = vunpack.c.0.s8 %v72
    %v89 = vunpack.c.0.s8 %v73
    %v90 = vunpack.c.1.s8 %v66
    %v91 = vunpack.c.1.s8 %v67
    %v92 = vunpack.c.1.s8 %v68
    %v93 = vunpack.c.1.s8 %v69
    %v94 = vunpack.c.1.s8 %v70
    %v95 = vunpack.c.1.s8 %v71
    %v96 = vunpack.c.1.s8 %v72
    %v97 = vunpack.c.1.s8 %v73
    %v98 = vunpack.c.2.s8 %v66
    %v99 = vunpack.c.2.s8 %v67
    %v100 = vunpack.c.2.s8 %v68
    %v101 = vunpack.c.2.s8 %v69
    %v102 = vunpack.c.2.s8 %v70
    %v103 = vunpack.c.2.s8 %v71
    %v104 = vunpack.c.2.s8 %v72
    %v105 = vunpack.c.2.s8 %v73
    %v106 = vunpack.c.3.s8 %v66
    %v107 = vunpack.c.3.s8 %v67
    %v108 = vunpack.c.3.s8 %v68
    %v109 = vunpack.c.3.s8 %v69
    %v110 = vunpack.c.3.s8 %v70
    %v111 = vunpack.c.3.s8 %v71
    %v112 = vunpack.c.3.s8 %v72
    %v113 = vunpack.c.3.s8 %v73
    %v114 = vunpack.c.0.s8 %v74
    %v115 = vunpack.c.0.s8 %v75
    %v116 = vunpack.c.0.s8 %v76
    %v117 = vunpack.c.0.s8 %v77
    %v118 = vunpack.c.0.s8 %v78
    %v119 = vunpack.c.0.s8 %v79
    %v120 = vunpack.c.0.s8 %v80
    %v121 = vunpack.c.0.s8 %v81
    %v122 = vunpack.c.1.s8 %v74
    %v123 = vunpack.c.1.s8 %v75
    %v124 = vunpack.c.1.s8 %v76
    %v125 = vunpack.c.1.s8 %v77
    %v126 = vunpack.c.1.s8 %v78
    %v127 = vunpack.c.1.s8 %v79
    %v128 = vunpack.c.1.s8 %v80
    %v129 = vunpack.c.1.s8 %v81
    %v130 = vunpack.c.2.s8 %v74
    %v131 = vunpack.c.2.s8 %v75
    %v132 = vunpack.c.2.s8 %v76
    %v133 = vunpack.c.2.s8 %v77
    %v134 = vunpack.c.2.s8 %v78
    %v135 = vunpack.c.2.s8 %v79
    %v136 = vunpack.c.2.s8 %v80
    %v137 = vunpack.c.2.s8 %v81
    %v138 = vunpack.c.3.s8 %v74
    %v139 = vunpack.c.3.s8 %v75
    %v140 = vunpack.c.3.s8 %v76
    %v141 = vunpack.c.3.s8 %v77
    %v142 = vunpack.c.3.s8 %v78
    %v143 = vunpack.c.3.s8 %v79
    %v144 = vunpack.c.3.s8 %v80
    %v145 = vunpack.c.3.s8 %v81
    %v146 = vcvt.s32.f32 %v82
    %v147 = vcvt.s32.f32 %v83
    %v148 = vcvt.s32.f32 %v84
    %v149 = vcvt.s32.f32 %v85
    %v150 = vcvt.s32.f32 %v86
    %v151 = vcvt.s32.f32 %v87
    %v152 = vcvt.s32.f32 %v88
    %v153 = vcvt.s32.f32 %v89
    %v154 = vcvt.s32.f32 %v90
    %v155 = vcvt.s32.f32 %v91
    %v156 = vcvt.s32.f32 %v92
    %v157 = vcvt.s32.f32 %v93
    %v158 = vcvt.s32.f32 %v94
    %v159 = vcvt.s32.f32 %v95
    %v160 = vcvt.s32.f32 %v96
    %v161 = vcvt.s32.f32 %v97
    %v162 = vcvt.s32.f32 %v98
    %v163 = vcvt.s32.f32 %v99
    %v164 = vcvt.s32.f32 %v100
    %v165 = vcvt.s32.f32 %v101
    %v166 = vcvt.s32.f32 %v102
    %v167 = vcvt.s32.f32 %v103
    %v168 = vcvt.s32.f32 %v104
    %v169 = vcvt.s32.f32 %v105
    %v170 = vcvt.s32.f32 %v106
    %v171 = vcvt.s32.f32 %v107
    %v172 = vcvt.s32.f32 %v108
    %v173 = vcvt.s32.f32 %v109
    %v174 = vcvt.s32.f32 %v110
    %v175 = vcvt.s32.f32 %v111
    %v176 = vcvt.s32.f32 %v112
    %v177 = vcvt.s32.f32 %v113
    %v178 = vcvt.s32.f32 %v114
    %v179 = vcvt.s32.f32 %v115
    %v180 = vcvt.s32.f32 %v116
    %v181 = vcvt.s32.f32 %v117
    %v182 = vcvt.s32.f32 %v118
    %v183 = vcvt.s32.f32 %v119
    %v184 = vcvt.s32.f32 %v120
    %v185 = vcvt.s32.f32 %v121
    %v186 = vcvt.s32.f32 %v122
    %v187 = vcvt.s32.f32 %v123
    %v188 = vcvt.s32.f32 %v124
    %v189 = vcvt.s32.f32 %v125
    %v190 = vcvt.s32.f32 %v126
    %v191 = vcvt.s32.f32 %v127
    %v192 = vcvt.s32.f32 %v128
    %v193 = vcvt.s32.f32 %v129
    %v194 = vcvt.s32.f32 %v130
    %v195 = vcvt.s32.f32 %v131
    %v196 = vcvt.s32.f32 %v132
    %v197 = vcvt.s32.f32 %v133
    %v198 = vcvt.s32.f32 %v134
    %v199 = vcvt.s32.f32 %v135
    %v200 = vcvt.s32.f32 %v136
    %v201 = vcvt.s32.f32 %v137
    %v202 = vcvt.s32.f32 %v138
    %v203 = vcvt.s32.f32 %v139
    %v204 = vcvt.s32.f32 %v140
    %v205 = vcvt.s32.f32 %v141
    %v206 = vcvt.s32.f32 %v142
    %v207 = vcvt.s32.f32 %v143
    %v208 = vcvt.s32.f32 %v144
    %v209 = vcvt.s32.f32 %v145
    %v210 = vld [vmem:[%s2 + $0x80] sm:$0xff]
    %v211 = vld [vmem:[%s2 + $0x88] sm:$0xff]
    %v212 = vld [vmem:[%s2 + $0x90] sm:$0xff]
    %v213 = vld [vmem:[%s2 + $0x98] sm:$0xff]
    %v214 = vld [vmem:[%s2 + $0xa0] sm:$0xff]
    %v215 = vld [vmem:[%s2 + $0xa8] sm:$0xff]
    %v216 = vld [vmem:[%s2 + $0xb0] sm:$0xff]
    %v217 = vld [vmem:[%s2 + $0xb8] sm:$0xff]
    %v218 = vunpack.c.0.s8 %v210
    %v219 = vunpack.c.0.s8 %v211
    %v220 = vunpack.c.0.s8 %v212
    %v221 = vunpack.c.0.s8 %v213
    %v222 = vunpack.c.0.s8 %v214
    %v223 = vunpack.c.0.s8 %v215
    %v224 = vunpack.c.0.s8 %v216
    %v225 = vunpack.c.0.s8 %v217
    %v226 = vunpack.c.1.s8 %v210
    %v227 = vunpack.c.1.s8 %v211
    %v228 = vunpack.c.1.s8 %v212
    %v229 = vunpack.c.1.s8 %v213
    %v230 = vunpack.c.1.s8 %v214
    %v231 = vunpack.c.1.s8 %v215
    %v232 = vunpack.c.1.s8 %v216
    %v233 = vunpack.c.1.s8 %v217
    %v234 = vunpack.c.2.s8 %v210
    %v235 = vunpack.c.2.s8 %v211
    %v236 = vunpack.c.2.s8 %v212
    %v237 = vunpack.c.2.s8 %v213
    %v238 = vunpack.c.2.s8 %v214
    %v239 = vunpack.c.2.s8 %v215
    %v240 = vunpack.c.2.s8 %v216
    %v241 = vunpack.c.2.s8 %v217
    %v242 = vunpack.c.3.s8 %v210
    %v243 = vunpack.c.3.s8 %v211
    %v244 = vunpack.c.3.s8 %v212
    %v245 = vunpack.c.3.s8 %v213
    %v246 = vunpack.c.3.s8 %v214
    %v247 = vunpack.c.3.s8 %v215
    %v248 = vunpack.c.3.s8 %v216
    %v249 = vunpack.c.3.s8 %v217
    %v250 = vcvt.s32.f32 %v218
    %v251 = vcvt.s32.f32 %v219
    %v252 = vcvt.s32.f32 %v220
    %v253 = vcvt.s32.f32 %v221
    %v254 = vcvt.s32.f32 %v222
    %v255 = vcvt.s32.f32 %v223
    %v256 = vcvt.s32.f32 %v224
    %v257 = vcvt.s32.f32 %v225
    %v258 = vcvt.s32.f32 %v226
    %v259 = vcvt.s32.f32 %v227
    %v260 = vcvt.s32.f32 %v228
    %v261 = vcvt.s32.f32 %v229
    %v262 = vcvt.s32.f32 %v230
    %v263 = vcvt.s32.f32 %v231
    %v264 = vcvt.s32.f32 %v232
    %v265 = vcvt.s32.f32 %v233
    %v266 = vcvt.s32.f32 %v234
    %v267 = vcvt.s32.f32 %v235
    %v268 = vcvt.s32.f32 %v236
    %v269 = vcvt.s32.f32 %v237
    %v270 = vcvt.s32.f32 %v238
    %v271 = vcvt.s32.f32 %v239
    %v272 = vcvt.s32.f32 %v240
    %v273 = vcvt.s32.f32 %v241
    %v274 = vcvt.s32.f32 %v242
    %v275 = vcvt.s32.f32 %v243
    %v276 = vcvt.s32.f32 %v244
    %v277 = vcvt.s32.f32 %v245
    %v278 = vcvt.s32.f32 %v246
    %v279 = vcvt.s32.f32 %v247
    %v280 = vcvt.s32.f32 %v248
    %v281 = vcvt.s32.f32 %v249
    %v282 = vld [vmem:[%s7] sm:$0xff]
    %v283 = vld [vmem:[%s7 + $0x8] sm:$0xff]
    %v284 = vld [vmem:[%s7 + $0x10] sm:$0xff]
    %v285 = vld [vmem:[%s7 + $0x18] sm:$0xff]
    %v286 = vld [vmem:[%s7 + $0x20] sm:$0xff]
    %v287 = vld [vmem:[%s7 + $0x28] sm:$0xff]
    %v288 = vld [vmem:[%s7 + $0x30] sm:$0xff]
    %v289 = vld [vmem:[%s7 + $0x38] sm:$0xff]
    %v290 = vld [vmem:[%s5] sm:$0xf]
    %v291 = vld [vmem:[%s5 + $0x4] sm:$0xf]
    %v292 = vld [vmem:[%s5 + $0x8] sm:$0xf]
    %v293 = vld [vmem:[%s5 + $0xc] sm:$0xf]
    %v294 = vld [vmem:[%s5 + $0x10] sm:$0xf]
    %v295 = vld [vmem:[%s5 + $0x14] sm:$0xf]
    %v296 = vld [vmem:[%s5 + $0x18] sm:$0xf]
    %v297 = vld [vmem:[%s5 + $0x1c] sm:$0xf]
    %v298 = vld [vmem:[%s1] sm:$0xff]
    %v299 = vld [vmem:[%s1 + $0x8] sm:$0xff]
    %v300 = vld [vmem:[%s1 + $0x10] sm:$0xff]
    %v301 = vld [vmem:[%s1 + $0x18] sm:$0xff]
    %v302 = vld [vmem:[%s1 + $0x20] sm:$0xff]
    %v303 = vld [vmem:[%s1 + $0x28] sm:$0xff]
    %v304 = vld [vmem:[%s1 + $0x30] sm:$0xff]
    %v305 = vld [vmem:[%s1 + $0x38] sm:$0xff]
    %v306 = vld [vmem:[%s1 + $0x40] sm:$0xff]
    %v307 = vld [vmem:[%s1 + $0x48] sm:$0xff]
    %v308 = vld [vmem:[%s1 + $0x50] sm:$0xff]
    %v309 = vld [vmem:[%s1 + $0x58] sm:$0xff]
    %v310 = vld [vmem:[%s1 + $0x60] sm:$0xff]
    %v311 = vld [vmem:[%s1 + $0x68] sm:$0xff]
    %v312 = vld [vmem:[%s1 + $0x70] sm:$0xff]
    %v313 = vld [vmem:[%s1 + $0x78] sm:$0xff]
    %315 = vset.pattern.permute.xlu0 0
    %316 = vperm.xlu0 %315, %v282
    %v317 = vpop.permute.xlu0 %316
    %320 = vset.pattern.permute.xlu0 0
    %321 = vperm.xlu0 %320, %v283
    %v322 = vpop.permute.xlu0 %321
    %325 = vset.pattern.permute.xlu0 0
    %326 = vperm.xlu0 %325, %v284
    %v327 = vpop.permute.xlu0 %326
    %330 = vset.pattern.permute.xlu0 0
    %331 = vperm.xlu0 %330, %v285
    %v332 = vpop.permute.xlu0 %331
    %335 = vset.pattern.permute.xlu0 0
    %336 = vperm.xlu0 %335, %v286
    %v337 = vpop.permute.xlu0 %336
    %340 = vset.pattern.permute.xlu0 0
    %341 = vperm.xlu0 %340, %v287
    %v342 = vpop.permute.xlu0 %341
    %345 = vset.pattern.permute.xlu0 0
    %346 = vperm.xlu0 %345, %v288
    %v347 = vpop.permute.xlu0 %346
    %350 = vset.pattern.permute.xlu0 0
    %351 = vperm.xlu0 %350, %v289
    %v352 = vpop.permute.xlu0 %351
    %v362 = vunpack.c.l.b16 %v290
    %v363 = vunpack.c.l.b16 %v291
    %v364 = vunpack.c.l.b16 %v292
    %v365 = vunpack.c.l.b16 %v293
    %v366 = vunpack.c.l.b16 %v294
    %v367 = vunpack.c.l.b16 %v295
    %v368 = vunpack.c.l.b16 %v296
    %v369 = vunpack.c.l.b16 %v297
    %v370 = vpack.c.b16 %v363, %v362
    %v371 = vpack.c.b16 %v365, %v364
    %v372 = vpack.c.b16 %v367, %v366
    %v373 = vpack.c.b16 %v369, %v368
    %v390 = vunpack.c.l.b16 %v298
    %v391 = vunpack.c.h.b16 %v298
    %v392 = vunpack.c.l.b16 %v299
    %v393 = vunpack.c.h.b16 %v299
    %v394 = vunpack.c.l.b16 %v300
    %v395 = vunpack.c.h.b16 %v300
    %v396 = vunpack.c.l.b16 %v301
    %v397 = vunpack.c.h.b16 %v301
    %v398 = vunpack.c.l.b16 %v302
    %v399 = vunpack.c.h.b16 %v302
    %v400 = vunpack.c.l.b16 %v303
    %v401 = vunpack.c.h.b16 %v303
    %v402 = vunpack.c.l.b16 %v304
    %v403 = vunpack.c.h.b16 %v304
    %v404 = vunpack.c.l.b16 %v305
    %v405 = vunpack.c.h.b16 %v305
    %v406 = vunpack.c.l.b16 %v306
    %v407 = vunpack.c.h.b16 %v306
    %v408 = vunpack.c.l.b16 %v307
    %v409 = vunpack.c.h.b16 %v307
    %v410 = vunpack.c.l.b16 %v308
    %v411 = vunpack.c.h.b16 %v308
    %v412 = vunpack.c.l.b16 %v309
    %v413 = vunpack.c.h.b16 %v309
    %v414 = vunpack.c.l.b16 %v310
    %v415 = vunpack.c.h.b16 %v310
    %v416 = vunpack.c.l.b16 %v311
    %v417 = vunpack.c.h.b16 %v311
    %v418 = vunpack.c.l.b16 %v312
    %v419 = vunpack.c.h.b16 %v312
    %v420 = vunpack.c.l.b16 %v313
    %v421 = vunpack.c.h.b16 %v313
    %v422 = vpack.c.b16 %v398, %v390
    %v423 = vpack.c.b16 %v399, %v391
    %v424 = vpack.c.b16 %v400, %v392
    %v425 = vpack.c.b16 %v401, %v393
    %v426 = vpack.c.b16 %v402, %v394
    %v427 = vpack.c.b16 %v403, %v395
    %v428 = vpack.c.b16 %v404, %v396
    %v429 = vpack.c.b16 %v405, %v397
    %v430 = vpack.c.b16 %v414, %v406
    %v431 = vpack.c.b16 %v415, %v407
    %v432 = vpack.c.b16 %v416, %v408
    %v433 = vpack.c.b16 %v417, %v409
    %v434 = vpack.c.b16 %v418, %v410
    %v435 = vpack.c.b16 %v419, %v411
    %v436 = vpack.c.b16 %v420, %v412
    %v437 = vpack.c.b16 %v421, %v413
    %vm454 = vcmask 261120
    %v456 = vsel %vm454, %v370, 0
    %v459 = vsel %vm454, %v371, 0
    %v462 = vsel %vm454, %v372, 0
    %v465 = vsel %vm454, %v373, 0
    %467 = vmatprep.subr.bf16.mxu0 %v423
    %468 = vmatpush1.bf16.msra.mxu0 %v422
    %469 = vmatprep.subr.bf16.mxu0 %v431
    %470 = vmatpush1.bf16.msra.mxu0 %v430
    %471 = vmatprep.subr.bf16.mxu0 0
    %472 = vmatpush1.bf16.msra.mxu0 0
    %473 = vmatprep.subr.bf16.mxu0 0
    %474 = vmatpush1.bf16.msra.mxu0 0
    %475 = vmatprep.subr.bf16.mxu0 0
    %476 = vmatpush1.bf16.msra.mxu0 0
    %477 = vmatprep.subr.bf16.mxu0 0
    %478 = vmatpush1.bf16.msra.mxu0 0
    %479 = vmatprep.subr.bf16.mxu0 0
    %480 = vmatpush1.bf16.msra.mxu0 0
    %481 = vmatprep.subr.bf16.mxu0 0
    %482 = vmatpush1.bf16.msra.mxu0 0
    %483 = vmatprep.subr.bf16.mxu0 0
    %484 = vmatpush1.bf16.msra.mxu0 0
    %485 = vmatprep.subr.bf16.mxu0 0
    %486 = vmatpush1.bf16.msra.mxu0 0
    %487 = vmatprep.subr.bf16.mxu0 0
    %488 = vmatpush1.bf16.msra.mxu0 0
    %489 = vmatprep.subr.bf16.mxu0 0
    %490 = vmatpush1.bf16.msra.mxu0 0
    %491 = vmatprep.subr.bf16.mxu0 0
    %492 = vmatpush1.bf16.msra.mxu0 0
    %493 = vmatprep.subr.bf16.mxu0 0
    %494 = vmatpush1.bf16.msra.mxu0 0
    %495 = vmatprep.subr.bf16.mxu0 0
    %496 = vmatpush1.bf16.msra.mxu0 0
    %497 = vmatprep.subr.bf16.mxu0 0
    %498 = vmatpush1.bf16.msra.mxu0 0
    %499 = vmatprep.mubr.bf16.mxu0 0
    %500 = vmatmul.mubr.bf16.gmra.mrb[0].mxu0 %v456
    %v501 = vpop.f32.mrb[0].mxu0
    %v502 = vadd.f32 %v317, %v501
    %v503 = vpop.f32.mrb[0].mxu0
    %v504 = vadd.f32 %v317, %v503
    %v505 = vpop.f32.mrb[0].mxu0
    %v506 = vadd.f32 %v322, %v505
    %v507 = vpop.f32.mrb[0].mxu0
    %v508 = vadd.f32 %v322, %v507
    %509 = vmatprep.mubr.bf16.mxu0 0
    %510 = vmatmul.mubr.bf16.gmra.mrb[0].mxu0 %v459
    %v511 = vpop.f32.mrb[0].mxu0
    %v512 = vadd.f32 %v327, %v511
    %v513 = vpop.f32.mrb[0].mxu0
    %v514 = vadd.f32 %v327, %v513
    %v515 = vpop.f32.mrb[0].mxu0
    %v516 = vadd.f32 %v332, %v515
    %v517 = vpop.f32.mrb[0].mxu0
    %v518 = vadd.f32 %v332, %v517
    %519 = vmatprep.mubr.bf16.mxu0 0
    %520 = vmatmul.mubr.bf16.gmra.mrb[0].mxu0 %v462
    %v521 = vpop.f32.mrb[0].mxu0
    %v522 = vadd.f32 %v337, %v521
    %v523 = vpop.f32.mrb[0].mxu0
    %v524 = vadd.f32 %v337, %v523
    %v525 = vpop.f32.mrb[0].mxu0
    %v526 = vadd.f32 %v342, %v525
    %v527 = vpop.f32.mrb[0].mxu0
    %v528 = vadd.f32 %v342, %v527
    %529 = vmatprep.mubr.bf16.mxu0 0
    %530 = vmatmul.mubr.bf16.gmra.mrb[0].mxu0 %v465
    %v531 = vpop.f32.mrb[0].mxu0
    %v532 = vadd.f32 %v347, %v531
    %v533 = vpop.f32.mrb[0].mxu0
    %v534 = vadd.f32 %v347, %v533
    %v535 = vpop.f32.mrb[0].mxu0
    %v536 = vadd.f32 %v352, %v535
    %v537 = vpop.f32.mrb[0].mxu0
    %v538 = vadd.f32 %v352, %v537
    %539 = vdwg.mxu0
    %540 = vmatprep.subr.bf16.mxu0 %v425
    %541 = vmatpush1.bf16.msra.mxu0 %v424
    %542 = vmatprep.subr.bf16.mxu0 %v433
    %543 = vmatpush1.bf16.msra.mxu0 %v432
    %544 = vmatprep.subr.bf16.mxu0 0
    %545 = vmatpush1.bf16.msra.mxu0 0
    %546 = vmatprep.subr.bf16.mxu0 0
    %547 = vmatpush1.bf16.msra.mxu0 0
    %548 = vmatprep.subr.bf16.mxu0 0
    %549 = vmatpush1.bf16.msra.mxu0 0
    %550 = vmatprep.subr.bf16.mxu0 0
    %551 = vmatpush1.bf16.msra.mxu0 0
    %552 = vmatprep.subr.bf16.mxu0 0
    %553 = vmatpush1.bf16.msra.mxu0 0
    %554 = vmatprep.subr.bf16.mxu0 0
    %555 = vmatpush1.bf16.msra.mxu0 0
    %556 = vmatprep.subr.bf16.mxu0 0
    %557 = vmatpush1.bf16.msra.mxu0 0
    %558 = vmatprep.subr.bf16.mxu0 0
    %559 = vmatpush1.bf16.msra.mxu0 0
    %560 = vmatprep.subr.bf16.mxu0 0
    %561 = vmatpush1.bf16.msra.mxu0 0
    %562 = vmatprep.subr.bf16.mxu0 0
    %563 = vmatpush1.bf16.msra.mxu0 0
    %564 = vmatprep.subr.bf16.mxu0 0
    %565 = vmatpush1.bf16.msra.mxu0 0
    %566 = vmatprep.subr.bf16.mxu0 0
    %567 = vmatpush1.bf16.msra.mxu0 0
    %568 = vmatprep.subr.bf16.mxu0 0
    %569 = vmatpush1.bf16.msra.mxu0 0
    %570 = vmatprep.subr.bf16.mxu0 0
    %571 = vmatpush1.bf16.msra.mxu0 0
    %572 = vmatprep.mubr.bf16.mxu0 0
    %573 = vmatmul.mubr.bf16.gmra.mrb[0].mxu0 %v456
    %v574 = vpop.f32.mrb[0].mxu0
    %v575 = vadd.f32 %v317, %v574
    %v576 = vpop.f32.mrb[0].mxu0
    %v577 = vadd.f32 %v317, %v576
    %v578 = vpop.f32.mrb[0].mxu0
    %v579 = vadd.f32 %v322, %v578
    %v580 = vpop.f32.mrb[0].mxu0
    %v581 = vadd.f32 %v322, %v580
    %582 = vmatprep.mubr.bf16.mxu0 0
    %583 = vmatmul.mubr.bf16.gmra.mrb[0].mxu0 %v459
    %v584 = vpop.f32.mrb[0].mxu0
    %v585 = vadd.f32 %v327, %v584
    %v586 = vpop.f32.mrb[0].mxu0
    %v587 = vadd.f32 %v327, %v586
    %v588 = vpop.f32.mrb[0].mxu0
    %v589 = vadd.f32 %v332, %v588
    %v590 = vpop.f32.mrb[0].mxu0
    %v591 = vadd.f32 %v332, %v590
    %592 = vmatprep.mubr.bf16.mxu0 0
    %593 = vmatmul.mubr.bf16.gmra.mrb[0].mxu0 %v462
    %v594 = vpop.f32.mrb[0].mxu0
    %v595 = vadd.f32 %v337, %v594
    %v596 = vpop.f32.mrb[0].mxu0
    %v597 = vadd.f32 %v337, %v596
    %v598 = vpop.f32.mrb[0].mxu0
    %v599 = vadd.f32 %v342, %v598
    %v600 = vpop.f32.mrb[0].mxu0
    %v601 = vadd.f32 %v342, %v600
    %602 = vmatprep.mubr.bf16.mxu0 0
    %603 = vmatmul.mubr.bf16.gmra.mrb[0].mxu0 %v465
    %v604 = vpop.f32.mrb[0].mxu0
    %v605 = vadd.f32 %v347, %v604
    %v606 = vpop.f32.mrb[0].mxu0
    %v607 = vadd.f32 %v347, %v606
    %v608 = vpop.f32.mrb[0].mxu0
    %v609 = vadd.f32 %v352, %v608
    %v610 = vpop.f32.mrb[0].mxu0
    %v611 = vadd.f32 %v352, %v610
    %612 = vdwg.mxu0
    %613 = vmatprep.subr.bf16.mxu0 %v427
    %614 = vmatpush1.bf16.msra.mxu0 %v426
    %615 = vmatprep.subr.bf16.mxu0 %v435
    %616 = vmatpush1.bf16.msra.mxu0 %v434
    %617 = vmatprep.subr.bf16.mxu0 0
    %618 = vmatpush1.bf16.msra.mxu0 0
    %619 = vmatprep.subr.bf16.mxu0 0
    %620 = vmatpush1.bf16.msra.mxu0 0
    %621 = vmatprep.subr.bf16.mxu0 0
    %622 = vmatpush1.bf16.msra.mxu0 0
    %623 = vmatprep.subr.bf16.mxu0 0
    %624 = vmatpush1.bf16.msra.mxu0 0
    %625 = vmatprep.subr.bf16.mxu0 0
    %626 = vmatpush1.bf16.msra.mxu0 0
    %627 = vmatprep.subr.bf16.mxu0 0
    %628 = vmatpush1.bf16.msra.mxu0 0
    %629 = vmatprep.subr.bf16.mxu0 0
    %630 = vmatpush1.bf16.msra.mxu0 0
    %631 = vmatprep.subr.bf16.mxu0 0
    %632 = vmatpush1.bf16.msra.mxu0 0
    %633 = vmatprep.subr.bf16.mxu0 0
    %634 = vmatpush1.bf16.msra.mxu0 0
    %635 = vmatprep.subr.bf16.mxu0 0
    %636 = vmatpush1.bf16.msra.mxu0 0
    %637 = vmatprep.subr.bf16.mxu0 0
    %638 = vmatpush1.bf16.msra.mxu0 0
    %639 = vmatprep.subr.bf16.mxu0 0
    %640 = vmatpush1.bf16.msra.mxu0 0
    %641 = vmatprep.subr.bf16.mxu0 0
    %642 = vmatpush1.bf16.msra.mxu0 0
    %643 = vmatprep.subr.bf16.mxu0 0
    %644 = vmatpush1.bf16.msra.mxu0 0
    %645 = vmatprep.mubr.bf16.mxu0 0
    %646 = vmatmul.mubr.bf16.gmra.mrb[0].mxu0 %v456
    %v647 = vpop.f32.mrb[0].mxu0
    %v648 = vadd.f32 %v317, %v647
    %v649 = vpop.f32.mrb[0].mxu0
    %v650 = vadd.f32 %v317, %v649
    %v651 = vpop.f32.mrb[0].mxu0
    %v652 = vadd.f32 %v322, %v651
    %v653 = vpop.f32.mrb[0].mxu0
    %v654 = vadd.f32 %v322, %v653
    %655 = vmatprep.mubr.bf16.mxu0 0
    %656 = vmatmul.mubr.bf16.gmra.mrb[0].mxu0 %v459
    %v657 = vpop.f32.mrb[0].mxu0
    %v658 = vadd.f32 %v327, %v657
    %v659 = vpop.f32.mrb[0].mxu0
    %v660 = vadd.f32 %v327, %v659
    %v661 = vpop.f32.mrb[0].mxu0
    %v662 = vadd.f32 %v332, %v661
    %v663 = vpop.f32.mrb[0].mxu0
    %v664 = vadd.f32 %v332, %v663
    %665 = vmatprep.mubr.bf16.mxu0 0
    %666 = vmatmul.mubr.bf16.gmra.mrb[0].mxu0 %v462
    %v667 = vpop.f32.mrb[0].mxu0
    %v668 = vadd.f32 %v337, %v667
    %v669 = vpop.f32.mrb[0].mxu0
    %v670 = vadd.f32 %v337, %v669
    %v671 = vpop.f32.mrb[0].mxu0
    %v672 = vadd.f32 %v342, %v671
    %v673 = vpop.f32.mrb[0].mxu0
    %v674 = vadd.f32 %v342, %v673
    %675 = vmatprep.mubr.bf16.mxu0 0
    %676 = vmatmul.mubr.bf16.gmra.mrb[0].mxu0 %v465
    %v677 = vpop.f32.mrb[0].mxu0
    %v678 = vadd.f32 %v347, %v677
    %v679 = vpop.f32.mrb[0].mxu0
    %v680 = vadd.f32 %v347, %v679
    %v681 = vpop.f32.mrb[0].mxu0
    %v682 = vadd.f32 %v352, %v681
    %v683 = vpop.f32.mrb[0].mxu0
    %v684 = vadd.f32 %v352, %v683
    %685 = vdwg.mxu0
    %686 = vmatprep.subr.bf16.mxu0 %v429
    %687 = vmatpush1.bf16.msra.mxu0 %v428
    %688 = vmatprep.subr.bf16.mxu0 %v437
    %689 = vmatpush1.bf16.msra.mxu0 %v436
    %690 = vmatprep.subr.bf16.mxu0 0
    %691 = vmatpush1.bf16.msra.mxu0 0
    %692 = vmatprep.subr.bf16.mxu0 0
    %693 = vmatpush1.bf16.msra.mxu0 0
    %694 = vmatprep.subr.bf16.mxu0 0
    %695 = vmatpush1.bf16.msra.mxu0 0
    %696 = vmatprep.subr.bf16.mxu0 0
    %697 = vmatpush1.bf16.msra.mxu0 0
    %698 = vmatprep.subr.bf16.mxu0 0
    %699 = vmatpush1.bf16.msra.mxu0 0
    %700 = vmatprep.subr.bf16.mxu0 0
    %701 = vmatpush1.bf16.msra.mxu0 0
    %702 = vmatprep.subr.bf16.mxu0 0
    %703 = vmatpush1.bf16.msra.mxu0 0
    %704 = vmatprep.subr.bf16.mxu0 0
    %705 = vmatpush1.bf16.msra.mxu0 0
    %706 = vmatprep.subr.bf16.mxu0 0
    %707 = vmatpush1.bf16.msra.mxu0 0
    %708 = vmatprep.subr.bf16.mxu0 0
    %709 = vmatpush1.bf16.msra.mxu0 0
    %710 = vmatprep.subr.bf16.mxu0 0
    %711 = vmatpush1.bf16.msra.mxu0 0
    %712 = vmatprep.subr.bf16.mxu0 0
    %713 = vmatpush1.bf16.msra.mxu0 0
    %714 = vmatprep.subr.bf16.mxu0 0
    %715 = vmatpush1.bf16.msra.mxu0 0
    %716 = vmatprep.subr.bf16.mxu0 0
    %717 = vmatpush1.bf16.msra.mxu0 0
    %718 = vmatprep.mubr.bf16.mxu0 0
    %719 = vmatmul.mubr.bf16.gmra.mrb[0].mxu0 %v456
    %v720 = vpop.f32.mrb[0].mxu0
    %v721 = vadd.f32 %v317, %v720
    %v722 = vpop.f32.mrb[0].mxu0
    %v723 = vadd.f32 %v317, %v722
    %v724 = vpop.f32.mrb[0].mxu0
    %v725 = vadd.f32 %v322, %v724
    %v726 = vpop.f32.mrb[0].mxu0
    %v727 = vadd.f32 %v322, %v726
    %728 = vmatprep.mubr.bf16.mxu0 0
    %729 = vmatmul.mubr.bf16.gmra.mrb[0].mxu0 %v459
    %v730 = vpop.f32.mrb[0].mxu0
    %v731 = vadd.f32 %v327, %v730
    %v732 = vpop.f32.mrb[0].mxu0
    %v733 = vadd.f32 %v327, %v732
    %v734 = vpop.f32.mrb[0].mxu0
    %v735 = vadd.f32 %v332, %v734
    %v736 = vpop.f32.mrb[0].mxu0
    %v737 = vadd.f32 %v332, %v736
    %738 = vmatprep.mubr.bf16.mxu0 0
    %739 = vmatmul.mubr.bf16.gmra.mrb[0].mxu0 %v462
    %v740 = vpop.f32.mrb[0].mxu0
    %v741 = vadd.f32 %v337, %v740
    %v742 = vpop.f32.mrb[0].mxu0
    %v743 = vadd.f32 %v337, %v742
    %v744 = vpop.f32.mrb[0].mxu0
    %v745 = vadd.f32 %v342, %v744
    %v746 = vpop.f32.mrb[0].mxu0
    %v747 = vadd.f32 %v342, %v746
    %748 = vmatprep.mubr.bf16.mxu0 0
    %749 = vmatmul.mubr.bf16.gmra.mrb[0].mxu0 %v465
    %v750 = vpop.f32.mrb[0].mxu0
    %v751 = vadd.f32 %v347, %v750
    %v752 = vpop.f32.mrb[0].mxu0
    %v753 = vadd.f32 %v347, %v752
    %v754 = vpop.f32.mrb[0].mxu0
    %v755 = vadd.f32 %v352, %v754
    %v756 = vpop.f32.mrb[0].mxu0
    %v757 = vadd.f32 %v352, %v756
    %758 = vdwg.mxu0
    %v759 = vmax.f32 %v502, 0.0
    %v760 = vmax.f32 %v504, 0.0
    %v761 = vmax.f32 %v575, 0.0
    %v762 = vmax.f32 %v577, 0.0
    %v763 = vmax.f32 %v648, 0.0
    %v764 = vmax.f32 %v650, 0.0
    %v765 = vmax.f32 %v721, 0.0
    %v766 = vmax.f32 %v723, 0.0
    %v767 = vmax.f32 %v506, 0.0
    %v768 = vmax.f32 %v508, 0.0
    %v769 = vmax.f32 %v579, 0.0
    %v770 = vmax.f32 %v581, 0.0
    %v771 = vmax.f32 %v652, 0.0
    %v772 = vmax.f32 %v654, 0.0
    %v773 = vmax.f32 %v725, 0.0
    %v774 = vmax.f32 %v727, 0.0
    %v775 = vmax.f32 %v512, 0.0
    %v776 = vmax.f32 %v514, 0.0
    %v777 = vmax.f32 %v585, 0.0
    %v778 = vmax.f32 %v587, 0.0
    %v779 = vmax.f32 %v658, 0.0
    %v780 = vmax.f32 %v660, 0.0
    %v781 = vmax.f32 %v731, 0.0
    %v782 = vmax.f32 %v733, 0.0
    %v783 = vmax.f32 %v516, 0.0
    %v784 = vmax.f32 %v518, 0.0
    %v785 = vmax.f32 %v589, 0.0
    %v786 = vmax.f32 %v591, 0.0
    %v787 = vmax.f32 %v662, 0.0
    %v788 = vmax.f32 %v664, 0.0
    %v789 = vmax.f32 %v735, 0.0
    %v790 = vmax.f32 %v737, 0.0
    %v791 = vmax.f32 %v522, 0.0
    %v792 = vmax.f32 %v524, 0.0
    %v793 = vmax.f32 %v595, 0.0
    %v794 = vmax.f32 %v597, 0.0
    %v795 = vmax.f32 %v668, 0.0
    %v796 = vmax.f32 %v670, 0.0
    %v797 = vmax.f32 %v741, 0.0
    %v798 = vmax.f32 %v743, 0.0
    %v799 = vmax.f32 %v526, 0.0
    %v800 = vmax.f32 %v528, 0.0
    %v801 = vmax.f32 %v599, 0.0
    %v802 = vmax.f32 %v601, 0.0
    %v803 = vmax.f32 %v672, 0.0
    %v804 = vmax.f32 %v674, 0.0
    %v805 = vmax.f32 %v745, 0.0
    %v806 = vmax.f32 %v747, 0.0
    %v807 = vmax.f32 %v532, 0.0
    %v808 = vmax.f32 %v534, 0.0
    %v809 = vmax.f32 %v605, 0.0
    %v810 = vmax.f32 %v607, 0.0
    %v811 = vmax.f32 %v678, 0.0
    %v812 = vmax.f32 %v680, 0.0
    %v813 = vmax.f32 %v751, 0.0
    %v814 = vmax.f32 %v753, 0.0
    %v815 = vmax.f32 %v536, 0.0
    %v816 = vmax.f32 %v538, 0.0
    %v817 = vmax.f32 %v609, 0.0
    %v818 = vmax.f32 %v611, 0.0
    %v819 = vmax.f32 %v682, 0.0
    %v820 = vmax.f32 %v684, 0.0
    %v821 = vmax.f32 %v755, 0.0
    %v822 = vmax.f32 %v757, 0.0
    %v823 = vmul.f32 %v759, %v146
    %v824 = vmul.f32 %v760, %v147
    %v825 = vmul.f32 %v761, %v148
    %v826 = vmul.f32 %v762, %v149
    %v827 = vmul.f32 %v763, %v150
    %v828 = vmul.f32 %v764, %v151
    %v829 = vmul.f32 %v765, %v152
    %v830 = vmul.f32 %v766, %v153
    %v831 = vmul.f32 %v767, %v154
    %v832 = vmul.f32 %v768, %v155
    %v833 = vmul.f32 %v769, %v156
    %v834 = vmul.f32 %v770, %v157
    %v835 = vmul.f32 %v771, %v158
    %v836 = vmul.f32 %v772, %v159
    %v837 = vmul.f32 %v773, %v160
    %v838 = vmul.f32 %v774, %v161
    %v839 = vmul.f32 %v775, %v162
    %v840 = vmul.f32 %v776, %v163
    %v841 = vmul.f32 %v777, %v164
    %v842 = vmul.f32 %v778, %v165
    %v843 = vmul.f32 %v779, %v166
    %v844 = vmul.f32 %v780, %v167
    %v845 = vmul.f32 %v781, %v168
    %v846 = vmul.f32 %v782, %v169
    %v847 = vmul.f32 %v783, %v170
    %v848 = vmul.f32 %v784, %v171
    %v849 = vmul.f32 %v785, %v172
    %v850 = vmul.f32 %v786, %v173
    %v851 = vmul.f32 %v787, %v174
    %v852 = vmul.f32 %v788, %v175
    %v853 = vmul.f32 %v789, %v176
    %v854 = vmul.f32 %v790, %v177
    %v855 = vmul.f32 %v791, %v178
    %v856 = vmul.f32 %v792, %v179
    %v857 = vmul.f32 %v793, %v180
    %v858 = vmul.f32 %v794, %v181
    %v859 = vmul.f32 %v795, %v182
    %v860 = vmul.f32 %v796, %v183
    %v861 = vmul.f32 %v797, %v184
    %v862 = vmul.f32 %v798, %v185
    %v863 = vmul.f32 %v799, %v186
    %v864 = vmul.f32 %v800, %v187
    %v865 = vmul.f32 %v801, %v188
    %v866 = vmul.f32 %v802, %v189
    %v867 = vmul.f32 %v803, %v190
    %v868 = vmul.f32 %v804, %v191
    %v869 = vmul.f32 %v805, %v192
    %v870 = vmul.f32 %v806, %v193
    %v871 = vmul.f32 %v807, %v194
    %v872 = vmul.f32 %v808, %v195
    %v873 = vmul.f32 %v809, %v196
    %v874 = vmul.f32 %v810, %v197
    %v875 = vmul.f32 %v811, %v198
    %v876 = vmul.f32 %v812, %v199
    %v877 = vmul.f32 %v813, %v200
    %v878 = vmul.f32 %v814, %v201
    %v879 = vmul.f32 %v815, %v202
    %v880 = vmul.f32 %v816, %v203
    %v881 = vmul.f32 %v817, %v204
    %v882 = vmul.f32 %v818, %v205
    %v883 = vmul.f32 %v819, %v206
    %v884 = vmul.f32 %v820, %v207
    %v885 = vmul.f32 %v821, %v208
    %v886 = vmul.f32 %v822, %v209
    %v887 = vpack.c.bf16 %v831, %v823
    %v888 = vpack.c.bf16 %v832, %v824
    %v889 = vpack.c.bf16 %v833, %v825
    %v890 = vpack.c.bf16 %v834, %v826
    %v891 = vpack.c.bf16 %v835, %v827
    %v892 = vpack.c.bf16 %v836, %v828
    %v893 = vpack.c.bf16 %v837, %v829
    %v894 = vpack.c.bf16 %v838, %v830
    %v895 = vpack.c.bf16 %v847, %v839
    %v896 = vpack.c.bf16 %v848, %v840
    %v897 = vpack.c.bf16 %v849, %v841
    %v898 = vpack.c.bf16 %v850, %v842
    %v899 = vpack.c.bf16 %v851, %v843
    %v900 = vpack.c.bf16 %v852, %v844
    %v901 = vpack.c.bf16 %v853, %v845
    %v902 = vpack.c.bf16 %v854, %v846
    %v903 = vpack.c.bf16 %v863, %v855
    %v904 = vpack.c.bf16 %v864, %v856
    %v905 = vpack.c.bf16 %v865, %v857
    %v906 = vpack.c.bf16 %v866, %v858
    %v907 = vpack.c.bf16 %v867, %v859
    %v908 = vpack.c.bf16 %v868, %v860
    %v909 = vpack.c.bf16 %v869, %v861
    %v910 = vpack.c.bf16 %v870, %v862
    %v911 = vpack.c.bf16 %v879, %v871
    %v912 = vpack.c.bf16 %v880, %v872
    %v913 = vpack.c.bf16 %v881, %v873
    %v914 = vpack.c.bf16 %v882, %v874
    %v915 = vpack.c.bf16 %v883, %v875
    %v916 = vpack.c.bf16 %v884, %v876
    %v917 = vpack.c.bf16 %v885, %v877
    %v918 = vpack.c.bf16 %v886, %v878
    %v919 = vld [vmem:[%s6] sm:$0xf]
    %v920 = vld [vmem:[%s6 + $0x4] sm:$0xf]
    %v921 = vld [vmem:[%s6 + $0x8] sm:$0xf]
    %v922 = vld [vmem:[%s6 + $0xc] sm:$0xf]
    %923 = vset.pattern.permute.xlu0 1
    %924 = vperm.xlu0 %923, %v282
    %v925 = vpop.permute.xlu0 %924
    %927 = vset.pattern.permute.xlu0 1
    %928 = vperm.xlu0 %927, %v283
    %v929 = vpop.permute.xlu0 %928
    %931 = vset.pattern.permute.xlu0 1
    %932 = vperm.xlu0 %931, %v284
    %v933 = vpop.permute.xlu0 %932
    %935 = vset.pattern.permute.xlu0 1
    %936 = vperm.xlu0 %935, %v285
    %v937 = vpop.permute.xlu0 %936
    %v943 = vunpack.c.l.b16 %v919
    %v944 = vunpack.c.l.b16 %v920
    %v945 = vunpack.c.l.b16 %v921
    %v946 = vunpack.c.l.b16 %v922
    %v947 = vpack.c.b16 %v944, %v943
    %v948 = vpack.c.b16 %v946, %v945
    %vm949 = vcmask 523264
    %v951 = vsel %vm949, %v947, 0
    %v954 = vsel %vm949, %v948, 0
    %956 = vmatprep.subr.bf16.mxu0 %v888
    %957 = vmatpush1.bf16.msra.mxu0 %v887
    %958 = vmatprep.subr.bf16.mxu0 %v896
    %959 = vmatpush1.bf16.msra.mxu0 %v895
    %960 = vmatprep.subr.bf16.mxu0 %v904
    %961 = vmatpush1.bf16.msra.mxu0 %v903
    %962 = vmatprep.subr.bf16.mxu0 %v912
    %963 = vmatpush1.bf16.msra.mxu0 %v911
    %964 = vmatprep.subr.bf16.mxu0 0
    %965 = vmatpush1.bf16.msra.mxu0 0
    %966 = vmatprep.subr.bf16.mxu0 0
    %967 = vmatpush1.bf16.msra.mxu0 0
    %968 = vmatprep.subr.bf16.mxu0 0
    %969 = vmatpush1.bf16.msra.mxu0 0
    %970 = vmatprep.subr.bf16.mxu0 0
    %971 = vmatpush1.bf16.msra.mxu0 0
    %972 = vmatprep.subr.bf16.mxu0 0
    %973 = vmatpush1.bf16.msra.mxu0 0
    %974 = vmatprep.subr.bf16.mxu0 0
    %975 = vmatpush1.bf16.msra.mxu0 0
    %976 = vmatprep.subr.bf16.mxu0 0
    %977 = vmatpush1.bf16.msra.mxu0 0
    %978 = vmatprep.subr.bf16.mxu0 0
    %979 = vmatpush1.bf16.msra.mxu0 0
    %980 = vmatprep.subr.bf16.mxu0 0
    %981 = vmatpush1.bf16.msra.mxu0 0
    %982 = vmatprep.subr.bf16.mxu0 0
    %983 = vmatpush1.bf16.msra.mxu0 0
    %984 = vmatprep.subr.bf16.mxu0 0
    %985 = vmatpush1.bf16.msra.mxu0 0
    %986 = vmatprep.subr.bf16.mxu0 0
    %987 = vmatpush1.bf16.msra.mxu0 0
    %988 = vmatprep.mubr.bf16.mxu0 0
    %989 = vmatmul.mubr.bf16.gmra.mrb[0].mxu0 %v951
    %v990 = vpop.f32.mrb[0].mxu0
    %v991 = vadd.f32 %v925, %v990
    %v992 = vpop.f32.mrb[0].mxu0
    %v993 = vadd.f32 %v925, %v992
    %v994 = vpop.f32.mrb[0].mxu0
    %v995 = vadd.f32 %v929, %v994
    %v996 = vpop.f32.mrb[0].mxu0
    %v997 = vadd.f32 %v929, %v996
    %998 = vmatprep.mubr.bf16.mxu0 0
    %999 = vmatmul.mubr.bf16.gmra.mrb[0].mxu0 %v954
    %v1000 = vpop.f32.mrb[0].mxu0
    %v1001 = vadd.f32 %v933, %v1000
    %v1002 = vpop.f32.mrb[0].mxu0
    %v1003 = vadd.f32 %v933, %v1002
    %v1004 = vpop.f32.mrb[0].mxu0
    %v1005 = vadd.f32 %v937, %v1004
    %v1006 = vpop.f32.mrb[0].mxu0
    %v1007 = vadd.f32 %v937, %v1006
    %1008 = vdwg.mxu0
    %1009 = vmatprep.subr.bf16.mxu0 %v890
    %1010 = vmatpush1.bf16.msra.mxu0 %v889
    %1011 = vmatprep.subr.bf16.mxu0 %v898
    %1012 = vmatpush1.bf16.msra.mxu0 %v897
    %1013 = vmatprep.subr.bf16.mxu0 %v906
    %1014 = vmatpush1.bf16.msra.mxu0 %v905
    %1015 = vmatprep.subr.bf16.mxu0 %v914
    %1016 = vmatpush1.bf16.msra.mxu0 %v913
    %1017 = vmatprep.subr.bf16.mxu0 0
    %1018 = vmatpush1.bf16.msra.mxu0 0
    %1019 = vmatprep.subr.bf16.mxu0 0
    %1020 = vmatpush1.bf16.msra.mxu0 0
    %1021 = vmatprep.subr.bf16.mxu0 0
    %1022 = vmatpush1.bf16.msra.mxu0 0
    %1023 = vmatprep.subr.bf16.mxu0 0
    %1024 = vmatpush1.bf16.msra.mxu0 0
    %1025 = vmatprep.subr.bf16.mxu0 0
    %1026 = vmatpush1.bf16.msra.mxu0 0
    %1027 = vmatprep.subr.bf16.mxu0 0
    %1028 = vmatpush1.bf16.msra.mxu0 0
    %1029 = vmatprep.subr.bf16.mxu0 0
    %1030 = vmatpush1.bf16.msra.mxu0 0
    %1031 = vmatprep.subr.bf16.mxu0 0
    %1032 = vmatpush1.bf16.msra.mxu0 0
    %1033 = vmatprep.subr.bf16.mxu0 0
    %1034 = vmatpush1.bf16.msra.mxu0 0
    %1035 = vmatprep.subr.bf16.mxu0 0
    %1036 = vmatpush1.bf16.msra.mxu0 0
    %1037 = vmatprep.subr.bf16.mxu0 0
    %1038 = vmatpush1.bf16.msra.mxu0 0
    %1039 = vmatprep.subr.bf16.mxu0 0
    %1040 = vmatpush1.bf16.msra.mxu0 0
    %1041 = vmatprep.mubr.bf16.mxu0 0
    %1042 = vmatmul.mubr.bf16.gmra.mrb[0].mxu0 %v951
    %v1043 = vpop.f32.mrb[0].mxu0
    %v1044 = vadd.f32 %v925, %v1043
    %v1045 = vpop.f32.mrb[0].mxu0
    %v1046 = vadd.f32 %v925, %v1045
    %v1047 = vpop.f32.mrb[0].mxu0
    %v1048 = vadd.f32 %v929, %v1047
    %v1049 = vpop.f32.mrb[0].mxu0
    %v1050 = vadd.f32 %v929, %v1049
    %1051 = vmatprep.mubr.bf16.mxu0 0
    %1052 = vmatmul.mubr.bf16.gmra.mrb[0].mxu0 %v954
    %v1053 = vpop.f32.mrb[0].mxu0
    %v1054 = vadd.f32 %v933, %v1053
    %v1055 = vpop.f32.mrb[0].mxu0
    %v1056 = vadd.f32 %v933, %v1055
    %v1057 = vpop.f32.mrb[0].mxu0
    %v1058 = vadd.f32 %v937, %v1057
    %v1059 = vpop.f32.mrb[0].mxu0
    %v1060 = vadd.f32 %v937, %v1059
    %1061 = vdwg.mxu0
    %1062 = vmatprep.subr.bf16.mxu0 %v892
    %1063 = vmatpush1.bf16.msra.mxu0 %v891
    %1064 = vmatprep.subr.bf16.mxu0 %v900
    %1065 = vmatpush1.bf16.msra.mxu0 %v899
    %1066 = vmatprep.subr.bf16.mxu0 %v908
    %1067 = vmatpush1.bf16.msra.mxu0 %v907
    %1068 = vmatprep.subr.bf16.mxu0 %v916
    %1069 = vmatpush1.bf16.msra.mxu0 %v915
    %1070 = vmatprep.subr.bf16.mxu0 0
    %1071 = vmatpush1.bf16.msra.mxu0 0
    %1072 = vmatprep.subr.bf16.mxu0 0
    %1073 = vmatpush1.bf16.msra.mxu0 0
    %1074 = vmatprep.subr.bf16.mxu0 0
    %1075 = vmatpush1.bf16.msra.mxu0 0
    %1076 = vmatprep.subr.bf16.mxu0 0
    %1077 = vmatpush1.bf16.msra.mxu0 0
    %1078 = vmatprep.subr.bf16.mxu0 0
    %1079 = vmatpush1.bf16.msra.mxu0 0
    %1080 = vmatprep.subr.bf16.mxu0 0
    %1081 = vmatpush1.bf16.msra.mxu0 0
    %1082 = vmatprep.subr.bf16.mxu0 0
    %1083 = vmatpush1.bf16.msra.mxu0 0
    %1084 = vmatprep.subr.bf16.mxu0 0
    %1085 = vmatpush1.bf16.msra.mxu0 0
    %1086 = vmatprep.subr.bf16.mxu0 0
    %1087 = vmatpush1.bf16.msra.mxu0 0
    %1088 = vmatprep.subr.bf16.mxu0 0
    %1089 = vmatpush1.bf16.msra.mxu0 0
    %1090 = vmatprep.subr.bf16.mxu0 0
    %1091 = vmatpush1.bf16.msra.mxu0 0
    %1092 = vmatprep.subr.bf16.mxu0 0
    %1093 = vmatpush1.bf16.msra.mxu0 0
    %1094 = vmatprep.mubr.bf16.mxu0 0
    %1095 = vmatmul.mubr.bf16.gmra.mrb[0].mxu0 %v951
    %v1096 = vpop.f32.mrb[0].mxu0
    %v1097 = vadd.f32 %v925, %v1096
    %v1098 = vpop.f32.mrb[0].mxu0
    %v1099 = vadd.f32 %v925, %v1098
    %v1100 = vpop.f32.mrb[0].mxu0
    %v1101 = vadd.f32 %v929, %v1100
    %v1102 = vpop.f32.mrb[0].mxu0
    %v1103 = vadd.f32 %v929, %v1102
    %1104 = vmatprep.mubr.bf16.mxu0 0
    %1105 = vmatmul.mubr.bf16.gmra.mrb[0].mxu0 %v954
    %v1106 = vpop.f32.mrb[0].mxu0
    %v1107 = vadd.f32 %v933, %v1106
    %v1108 = vpop.f32.mrb[0].mxu0
    %v1109 = vadd.f32 %v933, %v1108
    %v1110 = vpop.f32.mrb[0].mxu0
    %v1111 = vadd.f32 %v937, %v1110
    %v1112 = vpop.f32.mrb[0].mxu0
    %v1113 = vadd.f32 %v937, %v1112
    %1114 = vdwg.mxu0
    %1115 = vmatprep.subr.bf16.mxu0 %v894
    %1116 = vmatpush1.bf16.msra.mxu0 %v893
    %1117 = vmatprep.subr.bf16.mxu0 %v902
    %1118 = vmatpush1.bf16.msra.mxu0 %v901
    %1119 = vmatprep.subr.bf16.mxu0 %v910
    %1120 = vmatpush1.bf16.msra.mxu0 %v909
    %1121 = vmatprep.subr.bf16.mxu0 %v918
    %1122 = vmatpush1.bf16.msra.mxu0 %v917
    %1123 = vmatprep.subr.bf16.mxu0 0
    %1124 = vmatpush1.bf16.msra.mxu0 0
    %1125 = vmatprep.subr.bf16.mxu0 0
    %1126 = vmatpush1.bf16.msra.mxu0 0
    %1127 = vmatprep.subr.bf16.mxu0 0
    %1128 = vmatpush1.bf16.msra.mxu0 0
    %1129 = vmatprep.subr.bf16.mxu0 0
    %1130 = vmatpush1.bf16.msra.mxu0 0
    %1131 = vmatprep.subr.bf16.mxu0 0
    %1132 = vmatpush1.bf16.msra.mxu0 0
    %1133 = vmatprep.subr.bf16.mxu0 0
    %1134 = vmatpush1.bf16.msra.mxu0 0
    %1135 = vmatprep.subr.bf16.mxu0 0
    %1136 = vmatpush1.bf16.msra.mxu0 0
    %1137 = vmatprep.subr.bf16.mxu0 0
    %1138 = vmatpush1.bf16.msra.mxu0 0
    %1139 = vmatprep.subr.bf16.mxu0 0
    %1140 = vmatpush1.bf16.msra.mxu0 0
    %1141 = vmatprep.subr.bf16.mxu0 0
    %1142 = vmatpush1.bf16.msra.mxu0 0
    %1143 = vmatprep.subr.bf16.mxu0 0
    %1144 = vmatpush1.bf16.msra.mxu0 0
    %1145 = vmatprep.subr.bf16.mxu0 0
    %1146 = vmatpush1.bf16.msra.mxu0 0
    %1147 = vmatprep.mubr.bf16.mxu0 0
    %1148 = vmatmul.mubr.bf16.gmra.mrb[0].mxu0 %v951
    %v1149 = vpop.f32.mrb[0].mxu0
    %v1150 = vadd.f32 %v925, %v1149
    %v1151 = vpop.f32.mrb[0].mxu0
    %v1152 = vadd.f32 %v925, %v1151
    %v1153 = vpop.f32.mrb[0].mxu0
    %v1154 = vadd.f32 %v929, %v1153
    %v1155 = vpop.f32.mrb[0].mxu0
    %v1156 = vadd.f32 %v929, %v1155
    %1157 = vmatprep.mubr.bf16.mxu0 0
    %1158 = vmatmul.mubr.bf16.gmra.mrb[0].mxu0 %v954
    %v1159 = vpop.f32.mrb[0].mxu0
    %v1160 = vadd.f32 %v933, %v1159
    %v1161 = vpop.f32.mrb[0].mxu0
    %v1162 = vadd.f32 %v933, %v1161
    %v1163 = vpop.f32.mrb[0].mxu0
    %v1164 = vadd.f32 %v937, %v1163
    %v1165 = vpop.f32.mrb[0].mxu0
    %v1166 = vadd.f32 %v937, %v1165
    %1167 = vdwg.mxu0
    %v1168 = vmax.f32 %v991, 0.0
    %v1169 = vmax.f32 %v993, 0.0
    %v1170 = vmax.f32 %v1044, 0.0
    %v1171 = vmax.f32 %v1046, 0.0
    %v1172 = vmax.f32 %v1097, 0.0
    %v1173 = vmax.f32 %v1099, 0.0
    %v1174 = vmax.f32 %v1150, 0.0
    %v1175 = vmax.f32 %v1152, 0.0
    %v1176 = vmax.f32 %v995, 0.0
    %v1177 = vmax.f32 %v997, 0.0
    %v1178 = vmax.f32 %v1048, 0.0
    %v1179 = vmax.f32 %v1050, 0.0
    %v1180 = vmax.f32 %v1101, 0.0
    %v1181 = vmax.f32 %v1103, 0.0
    %v1182 = vmax.f32 %v1154, 0.0
    %v1183 = vmax.f32 %v1156, 0.0
    %v1184 = vmax.f32 %v1001, 0.0
    %v1185 = vmax.f32 %v1003, 0.0
    %v1186 = vmax.f32 %v1054, 0.0
    %v1187 = vmax.f32 %v1056, 0.0
    %v1188 = vmax.f32 %v1107, 0.0
    %v1189 = vmax.f32 %v1109, 0.0
    %v1190 = vmax.f32 %v1160, 0.0
    %v1191 = vmax.f32 %v1162, 0.0
    %v1192 = vmax.f32 %v1005, 0.0
    %v1193 = vmax.f32 %v1007, 0.0
    %v1194 = vmax.f32 %v1058, 0.0
    %v1195 = vmax.f32 %v1060, 0.0
    %v1196 = vmax.f32 %v1111, 0.0
    %v1197 = vmax.f32 %v1113, 0.0
    %v1198 = vmax.f32 %v1164, 0.0
    %v1199 = vmax.f32 %v1166, 0.0
    %1200 = vset.pattern.permute.xlu0 2
    %1201 = vperm.xlu0 %1200, %v282
    %v1202 = vpop.permute.xlu0 %1201
    %1204 = vset.pattern.permute.xlu0 2
    %1205 = vperm.xlu0 %1204, %v283
    %v1206 = vpop.permute.xlu0 %1205
    %1208 = vset.pattern.permute.xlu0 2
    %1209 = vperm.xlu0 %1208, %v284
    %v1210 = vpop.permute.xlu0 %1209
    %1212 = vset.pattern.permute.xlu0 2
    %1213 = vperm.xlu0 %1212, %v285
    %v1214 = vpop.permute.xlu0 %1213
    %v1216 = vmul.f32 %v250, %v1202
    %v1217 = vmul.f32 %v251, %v1202
    %v1218 = vmul.f32 %v252, %v1202
    %v1219 = vmul.f32 %v253, %v1202
    %v1220 = vmul.f32 %v254, %v1202
    %v1221 = vmul.f32 %v255, %v1202
    %v1222 = vmul.f32 %v256, %v1202
    %v1223 = vmul.f32 %v257, %v1202
    %v1224 = vmul.f32 %v258, %v1206
    %v1225 = vmul.f32 %v259, %v1206
    %v1226 = vmul.f32 %v260, %v1206
    %v1227 = vmul.f32 %v261, %v1206
    %v1228 = vmul.f32 %v262, %v1206
    %v1229 = vmul.f32 %v263, %v1206
    %v1230 = vmul.f32 %v264, %v1206
    %v1231 = vmul.f32 %v265, %v1206
    %v1232 = vmul.f32 %v266, %v1210
    %v1233 = vmul.f32 %v267, %v1210
    %v1234 = vmul.f32 %v268, %v1210
    %v1235 = vmul.f32 %v269, %v1210
    %v1236 = vmul.f32 %v270, %v1210
    %v1237 = vmul.f32 %v271, %v1210
    %v1238 = vmul.f32 %v272, %v1210
    %v1239 = vmul.f32 %v273, %v1210
    %v1240 = vmul.f32 %v274, %v1214
    %v1241 = vmul.f32 %v275, %v1214
    %v1242 = vmul.f32 %v276, %v1214
    %v1243 = vmul.f32 %v277, %v1214
    %v1244 = vmul.f32 %v278, %v1214
    %v1245 = vmul.f32 %v279, %v1214
    %v1246 = vmul.f32 %v280, %v1214
    %v1247 = vmul.f32 %v281, %v1214
    %v1248 = vmul.f32 %v1168, %v1216
    %v1249 = vmul.f32 %v1169, %v1217
    %v1250 = vmul.f32 %v1170, %v1218
    %v1251 = vmul.f32 %v1171, %v1219
    %v1252 = vmul.f32 %v1172, %v1220
    %v1253 = vmul.f32 %v1173, %v1221
    %v1254 = vmul.f32 %v1174, %v1222
    %v1255 = vmul.f32 %v1175, %v1223
    %v1256 = vmul.f32 %v1176, %v1224
    %v1257 = vmul.f32 %v1177, %v1225
    %v1258 = vmul.f32 %v1178, %v1226
    %v1259 = vmul.f32 %v1179, %v1227
    %v1260 = vmul.f32 %v1180, %v1228
    %v1261 = vmul.f32 %v1181, %v1229
    %v1262 = vmul.f32 %v1182, %v1230
    %v1263 = vmul.f32 %v1183, %v1231
    %v1264 = vmul.f32 %v1184, %v1232
    %v1265 = vmul.f32 %v1185, %v1233
    %v1266 = vmul.f32 %v1186, %v1234
    %v1267 = vmul.f32 %v1187, %v1235
    %v1268 = vmul.f32 %v1188, %v1236
    %v1269 = vmul.f32 %v1189, %v1237
    %v1270 = vmul.f32 %v1190, %v1238
    %v1271 = vmul.f32 %v1191, %v1239
    %v1272 = vmul.f32 %v1192, %v1240
    %v1273 = vmul.f32 %v1193, %v1241
    %v1274 = vmul.f32 %v1194, %v1242
    %v1275 = vmul.f32 %v1195, %v1243
    %v1276 = vmul.f32 %v1196, %v1244
    %v1277 = vmul.f32 %v1197, %v1245
    %v1278 = vmul.f32 %v1198, %v1246
    %v1279 = vmul.f32 %v1199, %v1247
    %v1280 = vadd.f32 %v1248, %v1256
    %v1281 = vadd.f32 %v1280, %v1264
    %v1282 = vadd.f32 %v1281, %v1272
    %v1283 = vrot.slane %v1282, 4
    %v1284 = vadd.f32 %v1282, %v1283
    %v1285 = vrot.slane %v1284, 2
    %v1286 = vadd.f32 %v1284, %v1285
    %v1287 = vrot.slane %v1286, 1
    %v1288 = vadd.f32 %v1286, %v1287
    %v1289 = vadd.f32 %v1249, %v1257
    %v1290 = vadd.f32 %v1289, %v1265
    %v1291 = vadd.f32 %v1290, %v1273
    %v1292 = vrot.slane %v1291, 4
    %v1293 = vadd.f32 %v1291, %v1292
    %v1294 = vrot.slane %v1293, 2
    %v1295 = vadd.f32 %v1293, %v1294
    %v1296 = vrot.slane %v1295, 1
    %v1297 = vadd.f32 %v1295, %v1296
    %v1298 = vadd.f32 %v1250, %v1258
    %v1299 = vadd.f32 %v1298, %v1266
    %v1300 = vadd.f32 %v1299, %v1274
    %v1301 = vrot.slane %v1300, 4
    %v1302 = vadd.f32 %v1300, %v1301
    %v1303 = vrot.slane %v1302, 2
    %v1304 = vadd.f32 %v1302, %v1303
    %v1305 = vrot.slane %v1304, 1
    %v1306 = vadd.f32 %v1304, %v1305
    %v1307 = vadd.f32 %v1251, %v1259
    %v1308 = vadd.f32 %v1307, %v1267
    %v1309 = vadd.f32 %v1308, %v1275
    %v1310 = vrot.slane %v1309, 4
    %v1311 = vadd.f32 %v1309, %v1310
    %v1312 = vrot.slane %v1311, 2
    %v1313 = vadd.f32 %v1311, %v1312
    %v1314 = vrot.slane %v1313, 1
    %v1315 = vadd.f32 %v1313, %v1314
    %v1316 = vadd.f32 %v1252, %v1260
    %v1317 = vadd.f32 %v1316, %v1268
    %v1318 = vadd.f32 %v1317, %v1276
    %v1319 = vrot.slane %v1318, 4
    %v1320 = vadd.f32 %v1318, %v1319
    %v1321 = vrot.slane %v1320, 2
    %v1322 = vadd.f32 %v1320, %v1321
    %v1323 = vrot.slane %v1322, 1
    %v1324 = vadd.f32 %v1322, %v1323
    %v1325 = vadd.f32 %v1253, %v1261
    %v1326 = vadd.f32 %v1325, %v1269
    %v1327 = vadd.f32 %v1326, %v1277
    %v1328 = vrot.slane %v1327, 4
    %v1329 = vadd.f32 %v1327, %v1328
    %v1330 = vrot.slane %v1329, 2
    %v1331 = vadd.f32 %v1329, %v1330
    %v1332 = vrot.slane %v1331, 1
    %v1333 = vadd.f32 %v1331, %v1332
    %v1334 = vadd.f32 %v1254, %v1262
    %v1335 = vadd.f32 %v1334, %v1270
    %v1336 = vadd.f32 %v1335, %v1278
    %v1337 = vrot.slane %v1336, 4
    %v1338 = vadd.f32 %v1336, %v1337
    %v1339 = vrot.slane %v1338, 2
    %v1340 = vadd.f32 %v1338, %v1339
    %v1341 = vrot.slane %v1340, 1
    %v1342 = vadd.f32 %v1340, %v1341
    %v1343 = vadd.f32 %v1255, %v1263
    %v1344 = vadd.f32 %v1343, %v1271
    %v1345 = vadd.f32 %v1344, %v1279
    %v1346 = vrot.slane %v1345, 4
    %v1347 = vadd.f32 %v1345, %v1346
    %v1348 = vrot.slane %v1347, 2
    %v1349 = vadd.f32 %v1347, %v1348
    %v1350 = vrot.slane %v1349, 1
    %v1351 = vadd.f32 %v1349, %v1350
    %v1352 = vstv %s48
    %v1353 = vadd.f32 %v1288, %v1352
    %v1354 = vadd.f32 %v1297, %v1352
    %v1355 = vadd.f32 %v1306, %v1352
    %v1356 = vadd.f32 %v1315, %v1352
    %v1357 = vadd.f32 %v1324, %v1352
    %v1358 = vadd.f32 %v1333, %v1352
    %v1359 = vadd.f32 %v1342, %v1352
    %v1360 = vadd.f32 %v1351, %v1352
    %v1361 = vmul.f32 %v1353, %v58
    %v1362 = vmul.f32 %v1354, %v58
    %v1363 = vmul.f32 %v1355, %v58
    %v1364 = vmul.f32 %v1356, %v58
    %v1365 = vmul.f32 %v1357, %v58
    %v1366 = vmul.f32 %v1358, %v58
    %v1367 = vmul.f32 %v1359, %v58
    %v1368 = vmul.f32 %v1360, %v58
    %1369 = vst [vmem:[#allocation2] sm:$0x1] %v1361
    %1370 = vst [vmem:[#allocation2 + $0x1] sm:$0x1] %v1362
    %1371 = vst [vmem:[#allocation2 + $0x2] sm:$0x1] %v1363
    %1372 = vst [vmem:[#allocation2 + $0x3] sm:$0x1] %v1364
    %1373 = vst [vmem:[#allocation2 + $0x4] sm:$0x1] %v1365
    %1374 = vst [vmem:[#allocation2 + $0x5] sm:$0x1] %v1366
    %1375 = vst [vmem:[#allocation2 + $0x6] sm:$0x1] %v1367
    %1376 = vst [vmem:[#allocation2 + $0x7] sm:$0x1] %v1368
    %v1377 = vld [vmem:[#allocation2] sm:$0xff]
    %v1378 = vld [vmem:[%s3] sm:$0xff]
    %v1379 = vld [vmem:[%s4] sm:$0xff]
    %v1380 = vsub.f32 %v1377, %v1378
    %v1381 = vand.u32 2147483647, %v1380
    %1382 = vadd.xlane.f32.xlu0 %v1381
    %v1383 = vpop.xlane.xlu0 %1382
    %v1384 = vrcp.pop 128.0
    %v1385 = vmul.f32 %v1383, %v1384
    %v1386 = vsub.f32 %v1381, %v1385
    %v1387 = vmul.f32 %v1386, %v1386
    %1388 = vadd.xlane.f32.xlu0 %v1387
    %v1389 = vpop.xlane.xlu0 %1388
    %v1390 = vrcp.pop 127.0
    %v1391 = vmul.f32 %v1389, %v1390
    %v1392 = vrsqrt.pop %v1391
    %v1393 = vmul.f32 %v1391, %v1392
    %vm1394 = vcmp.eq.f32.partialorder %v1391, inf
    %v1395 = vsel %vm1394, %v1391, %v1393
    %vm1396 = vcmp.eq.f32.partialorder %v1391, 0.0
    %v1397 = vand.u32 %v1391, 2147483648
    %v1398 = vsel %vm1396, %v1397, %v1395
    %v1399 = vadd.f32 %v1398, 1e-08
    %v1400 = vrcp.pop %v1399
    %v1401 = vmul.f32 1.0, %v1400
    %v1402 = vmul.f32 %v1381, %v1401
    %v1403 = vmul.f32 %v1385, %v1401
    %v1404 = vsub.f32 %v1402, %v1403
    %v1405 = vstv %s47
    %v1406 = vmul.f32 %v1405, %v1404
    %v1407 = vxor.u32 %v1406, 2147483648
    %v1408 = vmul.f32 %v1407, 1.442695
    %v1409 = vpow.pop %v1408
    %v1410 = vadd.f32 %v1409, 1.0
    %v1411 = vrcp.pop %v1410
    %v1412 = vmul.f32 1.0, %v1411
    %v1413 = vstv %s46
    %v1414 = vmul.f32 %v1413, %v1412
    %v1415 = vmul.f32 %v1414, %v1379
    %v1416 = vmul.f32 %v1415, 0.1
    %v1417 = vadd.f32 %v1377, %v1416
    %v1418 = vmul.f32 %v1417, %v65
    %v1419 = vsub.f32 1.0, %v65
    %v1420 = vmul.f32 %v1377, %v1419
    %v1421 = vadd.f32 %v1418, %v1420
    %1422 = vst [vmem:[#allocation6] sm:$0xff] %v1421
    // Predicated region
    $region38: #{kintsugi_forward.1} parent=1 // pred_check
      _
    $region39: #{kintsugi_forward.1} parent=1 // pred_check_branch
      %1424 = sbr.rel (0) target = $region41
    $region40: #{kintsugi_forward.1} parent=1 // pred_region
      %s1426 = ssub.s32 128, 128
      %1427 = vsyncadd [#allocation4], %s1426
      %s1429 = sshll.u32 [#allocation6], 4
      %s1430 = int_to_ptr.vmem [resolvable:$true] %s1429
      %1432 = dma.vmem_to_hbm [thread:$0]  %s1430, 128, %s8, [#allocation4]
    $region41: #{kintsugi_forward.1} parent=1 // pred_fallthru
      _
    // Predicated region
    $region42: #{kintsugi_forward.1} parent=1 // pred_check
      _
    $region43: #{kintsugi_forward.1} parent=1 // pred_check_branch
      %1434 = sbr.rel (0) target = $region45
    $region44: #{kintsugi_forward.1} parent=1 // pred_region
      %1435 = dma.done [#allocation4], 128
    $region45: #{kintsugi_forward.1} parent=1 // pred_fallthru
      _
    %1436 = vsyncpa [#allocation4], 1
    %1437 = vsyncpa [#allocation5], 1

</llo_original>
